<compile_context>
chip_gen: v7x
topology: tpu7x:2x2x1
jax: 0.10.0
libtpu: 0.0.40
codegen_flags: <defaults>
</compile_context>

<pallas_src>
import functools

import jax
import jax.numpy as jnp
from jax.experimental import pallas as pl
from jax.experimental.pallas import tpu as pltpu


def _round_up(n, m):
    return -(-n // m) * m


def rnn_fc_kernel(*refs, num_layers, seq_len, batch, hidden_size):
    # refs = x(TB_pad,F), [wih_T, whh_T, bias(1,H)] * num_layers, wfc_T(H,C_pad),
    #        bfc(1,C_pad), out(TB_pad,C_pad), seq_scratch(TB_pad,H), xproj_scratch(TB_pad,H)
    x_ref = refs[0]
    layer_refs = refs[1:1 + 3 * num_layers]
    wfc_ref = refs[1 + 3 * num_layers]
    bfc_ref = refs[2 + 3 * num_layers]
    out_ref = refs[3 + 3 * num_layers]
    seq_ref = refs[4 + 3 * num_layers]          # hidden states, time-major rows (t*B + b)
    xp_ref = refs[5 + 3 * num_layers]           # per-layer hoisted input projection

    # Zero once so the padded rows of the hidden-state buffer are well defined.
    seq_ref[...] = jnp.zeros_like(seq_ref)

    for layer in range(num_layers):            # static Python unroll over layers
        wih_ref, whh_ref, b_ref = layer_refs[3 * layer:3 * layer + 3]

        # ---- Hoisted input projection: one batched MXU matmul for the whole sequence.
        # (For layer > 0 this reads seq_ref IN FULL before the recurrence overwrites it.)
        src = x_ref[...] if layer == 0 else seq_ref[...]
        xp_ref[...] = (
            jnp.dot(src, wih_ref[...], preferred_element_type=jnp.float32)
            + b_ref[...])                      # bias (b_ih + b_hh) folded in here

        whh = whh_ref[...]                      # (H, H)

        # ---- Serial recurrence, fully unrolled (seq_len is compile-time static).
        h = jnp.zeros((batch, hidden_size), jnp.float32)
        for t in range(seq_len):
            r = t * batch                       # static row offset into (TB_pad, H)
            h = jnp.tanh(
                xp_ref[pl.ds(r, batch), :]
                + jnp.dot(h, whh, preferred_element_type=jnp.float32))
            seq_ref[pl.ds(r, batch), :] = h

    # ---- FC head over every timestep: one (TB_pad, H) @ (H, C_pad) matmul, lane-dense store.
    out_ref[...] = (
        jnp.dot(seq_ref[...], wfc_ref[...], preferred_element_type=jnp.float32)
        + bfc_ref[...])


def rnn_forward(x, params, *, hidden_size, num_layers, num_classes):
    """x: (B, T, F) batch_first (PyTorch convention). Returns (B, T, num_classes)."""
    B, T, F = x.shape
    TB = T * B
    TB_pad = _round_up(TB, 8)                   # sublane-aligned row count
    C_pad = _round_up(max(num_classes, 1), 128)  # lane-dense output width

    # Time-major 2D input slab: row t*B + b. (Tiny at these shapes; at large T*B*F this
    # transpose would instead be folded into the kernel per the low-priority review item.)
    x_tm = jnp.transpose(x, (1, 0, 2)).reshape(TB, F).astype(jnp.float32)
    if TB_pad != TB:
        x_tm = jnp.pad(x_tm, ((0, TB_pad - TB), (0, 0)))

    inputs = [x_tm]
    for layer in range(num_layers):
        wih, whh, bih, bhh = params[f"l{layer}"]
        inputs += [
            wih.T.astype(jnp.float32),                             # (F_in, H)
            whh.T.astype(jnp.float32),                             # (H, H)
            (bih + bhh).reshape(1, hidden_size).astype(jnp.float32)]
    wfc, bfc = params["fc"]
    wfc_p = jnp.zeros((hidden_size, C_pad), jnp.float32).at[:, :num_classes].set(
        wfc.T.astype(jnp.float32))
    bfc_p = jnp.zeros((1, C_pad), jnp.float32).at[:, :num_classes].set(
        bfc.astype(jnp.float32))
    inputs += [wfc_p, bfc_p]

    kernel = functools.partial(
        rnn_fc_kernel, num_layers=num_layers, seq_len=T, batch=B,
        hidden_size=hidden_size)

    out_pad = pl.pallas_call(
        kernel,
        out_shape=jax.ShapeDtypeStruct((TB_pad, C_pad), jnp.float32),
        in_specs=[pl.BlockSpec(memory_space=pltpu.MemorySpace.VMEM)] * len(inputs),
        out_specs=pl.BlockSpec(memory_space=pltpu.MemorySpace.VMEM),
        scratch_shapes=[
            pltpu.VMEM((TB_pad, hidden_size), jnp.float32),   # seq (hidden states)
            pltpu.VMEM((TB_pad, hidden_size), jnp.float32),   # hoisted input projection
        ],
        compiler_params=pltpu.CompilerParams(vmem_limit_bytes=32 * 1024 * 1024),
    )(*inputs)

    out_tm = out_pad[:TB, :num_classes].reshape(T, B, num_classes)
    return jnp.transpose(out_tm, (1, 0, 2))     # (B, T, C)


def init_params(key, input_size, hidden_size, num_layers, num_classes):
    """Deterministic init matching the PyTorch parameter shapes (uniform ±1/sqrt(H))."""
    params = {}
    k = 1.0 / jnp.sqrt(jnp.float32(hidden_size))
    for layer in range(num_layers):
        in_f = input_size if layer == 0 else hidden_size
        key, k1, k2, k3, k4 = jax.random.split(key, 5)
        params[f"l{layer}"] = (
            jax.random.uniform(k1, (hidden_size, in_f), jnp.float32, -k, k),         # weight_ih
            jax.random.uniform(k2, (hidden_size, hidden_size), jnp.float32, -k, k),  # weight_hh
            jax.random.uniform(k3, (hidden_size,), jnp.float32, -k, k),              # bias_ih
            jax.random.uniform(k4, (hidden_size,), jnp.float32, -k, k),              # bias_hh
        )
    key, k1, k2 = jax.random.split(key, 3)
    params["fc"] = (
        jax.random.uniform(k1, (num_classes, hidden_size), jnp.float32, -k, k),      # fc.weight
        jax.random.uniform(k2, (num_classes,), jnp.float32, -k, k),                  # fc.bias
    )
    return params


def rnn_reference(x, params, *, hidden_size, num_layers):
    """Pure-JAX reference with identical semantics (validation only)."""
    B, T, _ = x.shape
    layer_in = x.astype(jnp.float32)
    for layer in range(num_layers):
        wih, whh, bih, bhh = params[f"l{layer}"]
        h = jnp.zeros((B, hidden_size), jnp.float32)
        outs = []
        for t in range(T):
            h = jnp.tanh(layer_in[:, t, :] @ wih.T + bih + h @ whh.T + bhh)
            outs.append(h)
        layer_in = jnp.stack(outs, axis=1)
    wfc, bfc = params["fc"]
    return layer_in @ wfc.T + bfc


if __name__ == "__main__":
    # Small shapes consistent with the module's forward (input_size=512 default model name).
    B, T = 2, 8
    INPUT_SIZE = 512
    HIDDEN = 32
    NUM_LAYERS = 2
    NUM_CLASSES = 2
    # TODO(synk): bidirectional=True branch not implemented (module default is False).

    key = jax.random.PRNGKey(0)
    key, xk = jax.random.split(key)
    x = jax.random.normal(xk, (B, T, INPUT_SIZE), jnp.float32)
    params = init_params(key, INPUT_SIZE, HIDDEN, NUM_LAYERS, NUM_CLASSES)

    out = rnn_forward(x, params, hidden_size=HIDDEN, num_layers=NUM_LAYERS,
                      num_classes=NUM_CLASSES)
    out = jax.block_until_ready(out)

    ref = rnn_reference(x, params, hidden_size=HIDDEN, num_layers=NUM_LAYERS)
    assert out.shape == (B, T, NUM_CLASSES), out.shape
    assert jnp.allclose(out, ref, atol=1e-4, rtol=1e-4), float(jnp.max(jnp.abs(out - ref)))

    print("KERNEL_OK")
</pallas_src>

<mosaic_0001>
module attributes {stable_mosaic.version = 11 : i64} {
  func.func @rnn_fc_kernel(%arg0: memref<16x512xf32, #tpu.memory_space<vmem>>, %arg1: memref<512x32xf32, #tpu.memory_space<vmem>>, %arg2: memref<32x32xf32, #tpu.memory_space<vmem>>, %arg3: memref<1x32xf32, #tpu.memory_space<vmem>>, %arg4: memref<32x32xf32, #tpu.memory_space<vmem>>, %arg5: memref<32x32xf32, #tpu.memory_space<vmem>>, %arg6: memref<1x32xf32, #tpu.memory_space<vmem>>, %arg7: memref<32x128xf32, #tpu.memory_space<vmem>>, %arg8: memref<1x128xf32, #tpu.memory_space<vmem>>, %arg9: memref<16x128xf32, #tpu.memory_space<vmem>>, %arg10: memref<16x32xf32, #tpu.memory_space<vmem>>, %arg11: memref<16x32xf32, #tpu.memory_space<vmem>>) attributes {dimension_semantics = [], scalar_prefetch = 0 : i64, scratch_operands = 2 : i64, tpu.core_type = #tpu.core_type<tc>} {
    %cst = arith.constant 0.000000e+00 : f32
    %0 = vector.broadcast %cst : f32 to vector<16x32xf32>
    %c0 = arith.constant 0 : index
    %c0_0 = arith.constant 0 : index
    %1 = vector.load %arg10[%c0, %c0_0] : memref<16x32xf32, #tpu.memory_space<vmem>>, vector<16x32xf32>
    tpu.vector_store %arg10[%c0, %c0_0], %0 {strides = array<i32>} : memref<16x32xf32, #tpu.memory_space<vmem>>, vector<16x32xf32>,
    %c0_1 = arith.constant 0 : index
    %c0_2 = arith.constant 0 : index
    %2 = vector.load %arg0[%c0_1, %c0_2] : memref<16x512xf32, #tpu.memory_space<vmem>>, vector<16x512xf32>
    %c0_3 = arith.constant 0 : index
    %c0_4 = arith.constant 0 : index
    %3 = vector.load %arg1[%c0_3, %c0_4] : memref<512x32xf32, #tpu.memory_space<vmem>>, vector<512x32xf32>
    %cst_5 = arith.constant dense<0.000000e+00> : vector<16x32xf32>
    %4 = tpu.matmul %2, %3, %cst_5 {dimension_numbers = #tpu.dot_dimension_numbers<[1], [0], [0], [1], [0, 0, 1, 1], [], []>} : vector<16x512xf32>, vector<512x32xf32>, vector<16x32xf32> -> vector<16x32xf32>
    %c0_6 = arith.constant 0 : index
    %c0_7 = arith.constant 0 : index
    %5 = vector.load %arg3[%c0_6, %c0_7] : memref<1x32xf32, #tpu.memory_space<vmem>>, vector<1x32xf32>
    %6 = vector.broadcast %5 : vector<1x32xf32> to vector<16x32xf32>
    %7 = arith.addf %4, %6 : vector<16x32xf32>
    %c0_8 = arith.constant 0 : index
    %c0_9 = arith.constant 0 : index
    %8 = vector.load %arg11[%c0_8, %c0_9] : memref<16x32xf32, #tpu.memory_space<vmem>>, vector<16x32xf32>
    tpu.vector_store %arg11[%c0_8, %c0_9], %7 {strides = array<i32>} : memref<16x32xf32, #tpu.memory_space<vmem>>, vector<16x32xf32>,
    %c0_10 = arith.constant 0 : index
    %c0_11 = arith.constant 0 : index
    %9 = vector.load %arg2[%c0_10, %c0_11] : memref<32x32xf32, #tpu.memory_space<vmem>>, vector<32x32xf32>
    %cst_12 = arith.constant 0.000000e+00 : f32
    %10 = vector.broadcast %cst_12 : f32 to vector<2x32xf32>
    %c0_13 = arith.constant 0 : index
    %c0_14 = arith.constant 0 : index
    %11 = vector.load %arg11[%c0_13, %c0_14] : memref<16x32xf32, #tpu.memory_space<vmem>>, vector<2x32xf32>
    %cst_15 = arith.constant dense<0.000000e+00> : vector<2x32xf32>
    %12 = tpu.matmul %10, %9, %cst_15 {dimension_numbers = #tpu.dot_dimension_numbers<[1], [0], [0], [1], [0, 0, 1, 1], [], []>} : vector<2x32xf32>, vector<32x32xf32>, vector<2x32xf32> -> vector<2x32xf32>
    %13 = arith.addf %11, %12 : vector<2x32xf32>
    %14 = math.tanh %13 : vector<2x32xf32>
    %c0_16 = arith.constant 0 : index
    %c0_17 = arith.constant 0 : index
    %15 = vector.load %arg10[%c0_16, %c0_17] : memref<16x32xf32, #tpu.memory_space<vmem>>, vector<2x32xf32>
    tpu.vector_store %arg10[%c0_16, %c0_17], %14 {strides = array<i32>} : memref<16x32xf32, #tpu.memory_space<vmem>>, vector<2x32xf32>,
    %c2 = arith.constant 2 : index
    %c0_18 = arith.constant 0 : index
    %16 = vector.load %arg11[%c2, %c0_18] : memref<16x32xf32, #tpu.memory_space<vmem>>, vector<2x32xf32>
    %cst_19 = arith.constant dense<0.000000e+00> : vector<2x32xf32>
    %17 = tpu.matmul %14, %9, %cst_19 {dimension_numbers = #tpu.dot_dimension_numbers<[1], [0], [0], [1], [0, 0, 1, 1], [], []>} : vector<2x32xf32>, vector<32x32xf32>, vector<2x32xf32> -> vector<2x32xf32>
    %18 = arith.addf %16, %17 : vector<2x32xf32>
    %19 = math.tanh %18 : vector<2x32xf32>
    %c2_20 = arith.constant 2 : index
    %c0_21 = arith.constant 0 : index
    %20 = vector.load %arg10[%c2_20, %c0_21] : memref<16x32xf32, #tpu.memory_space<vmem>>, vector<2x32xf32>
    tpu.vector_store %arg10[%c2_20, %c0_21], %19 {strides = array<i32>} : memref<16x32xf32, #tpu.memory_space<vmem>>, vector<2x32xf32>,
    %c4 = arith.constant 4 : index
    %c0_22 = arith.constant 0 : index
    %21 = vector.load %arg11[%c4, %c0_22] : memref<16x32xf32, #tpu.memory_space<vmem>>, vector<2x32xf32>
    %cst_23 = arith.constant dense<0.000000e+00> : vector<2x32xf32>
    %22 = tpu.matmul %19, %9, %cst_23 {dimension_numbers = #tpu.dot_dimension_numbers<[1], [0], [0], [1], [0, 0, 1, 1], [], []>} : vector<2x32xf32>, vector<32x32xf32>, vector<2x32xf32> -> vector<2x32xf32>
    %23 = arith.addf %21, %22 : vector<2x32xf32>
    %24 = math.tanh %23 : vector<2x32xf32>
    %c4_24 = arith.constant 4 : index
    %c0_25 = arith.constant 0 : index
    %25 = vector.load %arg10[%c4_24, %c0_25] : memref<16x32xf32, #tpu.memory_space<vmem>>, vector<2x32xf32>
    tpu.vector_store %arg10[%c4_24, %c0_25], %24 {strides = array<i32>} : memref<16x32xf32, #tpu.memory_space<vmem>>, vector<2x32xf32>,
    %c6 = arith.constant 6 : index
    %c0_26 = arith.constant 0 : index
    %26 = vector.load %arg11[%c6, %c0_26] : memref<16x32xf32, #tpu.memory_space<vmem>>, vector<2x32xf32>
    %cst_27 = arith.constant dense<0.000000e+00> : vector<2x32xf32>
    %27 = tpu.matmul %24, %9, %cst_27 {dimension_numbers = #tpu.dot_dimension_numbers<[1], [0], [0], [1], [0, 0, 1, 1], [], []>} : vector<2x32xf32>, vector<32x32xf32>, vector<2x32xf32> -> vector<2x32xf32>
    %28 = arith.addf %26, %27 : vector<2x32xf32>
    %29 = math.tanh %28 : vector<2x32xf32>
    %c6_28 = arith.constant 6 : index
    %c0_29 = arith.constant 0 : index
    %30 = vector.load %arg10[%c6_28, %c0_29] : memref<16x32xf32, #tpu.memory_space<vmem>>, vector<2x32xf32>
    tpu.vector_store %arg10[%c6_28, %c0_29], %29 {strides = array<i32>} : memref<16x32xf32, #tpu.memory_space<vmem>>, vector<2x32xf32>,
    %c8 = arith.constant 8 : index
    %c0_30 = arith.constant 0 : index
    %31 = vector.load %arg11[%c8, %c0_30] : memref<16x32xf32, #tpu.memory_space<vmem>>, vector<2x32xf32>
    %cst_31 = arith.constant dense<0.000000e+00> : vector<2x32xf32>
    %32 = tpu.matmul %29, %9, %cst_31 {dimension_numbers = #tpu.dot_dimension_numbers<[1], [0], [0], [1], [0, 0, 1, 1], [], []>} : vector<2x32xf32>, vector<32x32xf32>, vector<2x32xf32> -> vector<2x32xf32>
    %33 = arith.addf %31, %32 : vector<2x32xf32>
    %34 = math.tanh %33 : vector<2x32xf32>
    %c8_32 = arith.constant 8 : index
    %c0_33 = arith.constant 0 : index
    %35 = vector.load %arg10[%c8_32, %c0_33] : memref<16x32xf32, #tpu.memory_space<vmem>>, vector<2x32xf32>
    tpu.vector_store %arg10[%c8_32, %c0_33], %34 {strides = array<i32>} : memref<16x32xf32, #tpu.memory_space<vmem>>, vector<2x32xf32>,
    %c10 = arith.constant 10 : index
    %c0_34 = arith.constant 0 : index
    %36 = vector.load %arg11[%c10, %c0_34] : memref<16x32xf32, #tpu.memory_space<vmem>>, vector<2x32xf32>
    %cst_35 = arith.constant dense<0.000000e+00> : vector<2x32xf32>
    %37 = tpu.matmul %34, %9, %cst_35 {dimension_numbers = #tpu.dot_dimension_numbers<[1], [0], [0], [1], [0, 0, 1, 1], [], []>} : vector<2x32xf32>, vector<32x32xf32>, vector<2x32xf32> -> vector<2x32xf32>
    %38 = arith.addf %36, %37 : vector<2x32xf32>
    %39 = math.tanh %38 : vector<2x32xf32>
    %c10_36 = arith.constant 10 : index
    %c0_37 = arith.constant 0 : index
    %40 = vector.load %arg10[%c10_36, %c0_37] : memref<16x32xf32, #tpu.memory_space<vmem>>, vector<2x32xf32>
    tpu.vector_store %arg10[%c10_36, %c0_37], %39 {strides = array<i32>} : memref<16x32xf32, #tpu.memory_space<vmem>>, vector<2x32xf32>,
    %c12 = arith.constant 12 : index
    %c0_38 = arith.constant 0 : index
    %41 = vector.load %arg11[%c12, %c0_38] : memref<16x32xf32, #tpu.memory_space<vmem>>, vector<2x32xf32>
    %cst_39 = arith.constant dense<0.000000e+00> : vector<2x32xf32>
    %42 = tpu.matmul %39, %9, %cst_39 {dimension_numbers = #tpu.dot_dimension_numbers<[1], [0], [0], [1], [0, 0, 1, 1], [], []>} : vector<2x32xf32>, vector<32x32xf32>, vector<2x32xf32> -> vector<2x32xf32>
    %43 = arith.addf %41, %42 : vector<2x32xf32>
    %44 = math.tanh %43 : vector<2x32xf32>
    %c12_40 = arith.constant 12 : index
    %c0_41 = arith.constant 0 : index
    %45 = vector.load %arg10[%c12_40, %c0_41] : memref<16x32xf32, #tpu.memory_space<vmem>>, vector<2x32xf32>
    tpu.vector_store %arg10[%c12_40, %c0_41], %44 {strides = array<i32>} : memref<16x32xf32, #tpu.memory_space<vmem>>, vector<2x32xf32>,
    %c14 = arith.constant 14 : index
    %c0_42 = arith.constant 0 : index
    %46 = vector.load %arg11[%c14, %c0_42] : memref<16x32xf32, #tpu.memory_space<vmem>>, vector<2x32xf32>
    %cst_43 = arith.constant dense<0.000000e+00> : vector<2x32xf32>
    %47 = tpu.matmul %44, %9, %cst_43 {dimension_numbers = #tpu.dot_dimension_numbers<[1], [0], [0], [1], [0, 0, 1, 1], [], []>} : vector<2x32xf32>, vector<32x32xf32>, vector<2x32xf32> -> vector<2x32xf32>
    %48 = arith.addf %46, %47 : vector<2x32xf32>
    %49 = math.tanh %48 : vector<2x32xf32>
    %c14_44 = arith.constant 14 : index
    %c0_45 = arith.constant 0 : index
    %50 = vector.load %arg10[%c14_44, %c0_45] : memref<16x32xf32, #tpu.memory_space<vmem>>, vector<2x32xf32>
    tpu.vector_store %arg10[%c14_44, %c0_45], %49 {strides = array<i32>} : memref<16x32xf32, #tpu.memory_space<vmem>>, vector<2x32xf32>,
    %c0_46 = arith.constant 0 : index
    %c0_47 = arith.constant 0 : index
    %51 = vector.load %arg10[%c0_46, %c0_47] : memref<16x32xf32, #tpu.memory_space<vmem>>, vector<16x32xf32>
    %c0_48 = arith.constant 0 : index
    %c0_49 = arith.constant 0 : index
    %52 = vector.load %arg4[%c0_48, %c0_49] : memref<32x32xf32, #tpu.memory_space<vmem>>, vector<32x32xf32>
    %cst_50 = arith.constant dense<0.000000e+00> : vector<16x32xf32>
    %53 = tpu.matmul %51, %52, %cst_50 {dimension_numbers = #tpu.dot_dimension_numbers<[1], [0], [0], [1], [0, 0, 1, 1], [], []>} : vector<16x32xf32>, vector<32x32xf32>, vector<16x32xf32> -> vector<16x32xf32>
    %c0_51 = arith.constant 0 : index
    %c0_52 = arith.constant 0 : index
    %54 = vector.load %arg6[%c0_51, %c0_52] : memref<1x32xf32, #tpu.memory_space<vmem>>, vector<1x32xf32>
    %55 = vector.broadcast %54 : vector<1x32xf32> to vector<16x32xf32>
    %56 = arith.addf %53, %55 : vector<16x32xf32>
    %c0_53 = arith.constant 0 : index
    %c0_54 = arith.constant 0 : index
    %57 = vector.load %arg11[%c0_53, %c0_54] : memref<16x32xf32, #tpu.memory_space<vmem>>, vector<16x32xf32>
    tpu.vector_store %arg11[%c0_53, %c0_54], %56 {strides = array<i32>} : memref<16x32xf32, #tpu.memory_space<vmem>>, vector<16x32xf32>,
    %c0_55 = arith.constant 0 : index
    %c0_56 = arith.constant 0 : index
    %58 = vector.load %arg5[%c0_55, %c0_56] : memref<32x32xf32, #tpu.memory_space<vmem>>, vector<32x32xf32>
    %cst_57 = arith.constant 0.000000e+00 : f32
    %59 = vector.broadcast %cst_57 : f32 to vector<2x32xf32>
    %c0_58 = arith.constant 0 : index
    %c0_59 = arith.constant 0 : index
    %60 = vector.load %arg11[%c0_58, %c0_59] : memref<16x32xf32, #tpu.memory_space<vmem>>, vector<2x32xf32>
    %cst_60 = arith.constant dense<0.000000e+00> : vector<2x32xf32>
    %61 = tpu.matmul %59, %58, %cst_60 {dimension_numbers = #tpu.dot_dimension_numbers<[1], [0], [0], [1], [0, 0, 1, 1], [], []>} : vector<2x32xf32>, vector<32x32xf32>, vector<2x32xf32> -> vector<2x32xf32>
    %62 = arith.addf %60, %61 : vector<2x32xf32>
    %63 = math.tanh %62 : vector<2x32xf32>
    %c0_61 = arith.constant 0 : index
    %c0_62 = arith.constant 0 : index
    %64 = vector.load %arg10[%c0_61, %c0_62] : memref<16x32xf32, #tpu.memory_space<vmem>>, vector<2x32xf32>
    tpu.vector_store %arg10[%c0_61, %c0_62], %63 {strides = array<i32>} : memref<16x32xf32, #tpu.memory_space<vmem>>, vector<2x32xf32>,
    %c2_63 = arith.constant 2 : index
    %c0_64 = arith.constant 0 : index
    %65 = vector.load %arg11[%c2_63, %c0_64] : memref<16x32xf32, #tpu.memory_space<vmem>>, vector<2x32xf32>
    %cst_65 = arith.constant dense<0.000000e+00> : vector<2x32xf32>
    %66 = tpu.matmul %63, %58, %cst_65 {dimension_numbers = #tpu.dot_dimension_numbers<[1], [0], [0], [1], [0, 0, 1, 1], [], []>} : vector<2x32xf32>, vector<32x32xf32>, vector<2x32xf32> -> vector<2x32xf32>
    %67 = arith.addf %65, %66 : vector<2x32xf32>
    %68 = math.tanh %67 : vector<2x32xf32>
    %c2_66 = arith.constant 2 : index
    %c0_67 = arith.constant 0 : index
    %69 = vector.load %arg10[%c2_66, %c0_67] : memref<16x32xf32, #tpu.memory_space<vmem>>, vector<2x32xf32>
    tpu.vector_store %arg10[%c2_66, %c0_67], %68 {strides = array<i32>} : memref<16x32xf32, #tpu.memory_space<vmem>>, vector<2x32xf32>,
    %c4_68 = arith.constant 4 : index
    %c0_69 = arith.constant 0 : index
    %70 = vector.load %arg11[%c4_68, %c0_69] : memref<16x32xf32, #tpu.memory_space<vmem>>, vector<2x32xf32>
    %cst_70 = arith.constant dense<0.000000e+00> : vector<2x32xf32>
    %71 = tpu.matmul %68, %58, %cst_70 {dimension_numbers = #tpu.dot_dimension_numbers<[1], [0], [0], [1], [0, 0, 1, 1], [], []>} : vector<2x32xf32>, vector<32x32xf32>, vector<2x32xf32> -> vector<2x32xf32>
    %72 = arith.addf %70, %71 : vector<2x32xf32>
    %73 = math.tanh %72 : vector<2x32xf32>
    %c4_71 = arith.constant 4 : index
    %c0_72 = arith.constant 0 : index
    %74 = vector.load %arg10[%c4_71, %c0_72] : memref<16x32xf32, #tpu.memory_space<vmem>>, vector<2x32xf32>
    tpu.vector_store %arg10[%c4_71, %c0_72], %73 {strides = array<i32>} : memref<16x32xf32, #tpu.memory_space<vmem>>, vector<2x32xf32>,
    %c6_73 = arith.constant 6 : index
    %c0_74 = arith.constant 0 : index
    %75 = vector.load %arg11[%c6_73, %c0_74] : memref<16x32xf32, #tpu.memory_space<vmem>>, vector<2x32xf32>
    %cst_75 = arith.constant dense<0.000000e+00> : vector<2x32xf32>
    %76 = tpu.matmul %73, %58, %cst_75 {dimension_numbers = #tpu.dot_dimension_numbers<[1], [0], [0], [1], [0, 0, 1, 1], [], []>} : vector<2x32xf32>, vector<32x32xf32>, vector<2x32xf32> -> vector<2x32xf32>
    %77 = arith.addf %75, %76 : vector<2x32xf32>
    %78 = math.tanh %77 : vector<2x32xf32>
    %c6_76 = arith.constant 6 : index
    %c0_77 = arith.constant 0 : index
    %79 = vector.load %arg10[%c6_76, %c0_77] : memref<16x32xf32, #tpu.memory_space<vmem>>, vector<2x32xf32>
    tpu.vector_store %arg10[%c6_76, %c0_77], %78 {strides = array<i32>} : memref<16x32xf32, #tpu.memory_space<vmem>>, vector<2x32xf32>,
    %c8_78 = arith.constant 8 : index
    %c0_79 = arith.constant 0 : index
    %80 = vector.load %arg11[%c8_78, %c0_79] : memref<16x32xf32, #tpu.memory_space<vmem>>, vector<2x32xf32>
    %cst_80 = arith.constant dense<0.000000e+00> : vector<2x32xf32>
    %81 = tpu.matmul %78, %58, %cst_80 {dimension_numbers = #tpu.dot_dimension_numbers<[1], [0], [0], [1], [0, 0, 1, 1], [], []>} : vector<2x32xf32>, vector<32x32xf32>, vector<2x32xf32> -> vector<2x32xf32>
    %82 = arith.addf %80, %81 : vector<2x32xf32>
    %83 = math.tanh %82 : vector<2x32xf32>
    %c8_81 = arith.constant 8 : index
    %c0_82 = arith.constant 0 : index
    %84 = vector.load %arg10[%c8_81, %c0_82] : memref<16x32xf32, #tpu.memory_space<vmem>>, vector<2x32xf32>
    tpu.vector_store %arg10[%c8_81, %c0_82], %83 {strides = array<i32>} : memref<16x32xf32, #tpu.memory_space<vmem>>, vector<2x32xf32>,
    %c10_83 = arith.constant 10 : index
    %c0_84 = arith.constant 0 : index
    %85 = vector.load %arg11[%c10_83, %c0_84] : memref<16x32xf32, #tpu.memory_space<vmem>>, vector<2x32xf32>
    %cst_85 = arith.constant dense<0.000000e+00> : vector<2x32xf32>
    %86 = tpu.matmul %83, %58, %cst_85 {dimension_numbers = #tpu.dot_dimension_numbers<[1], [0], [0], [1], [0, 0, 1, 1], [], []>} : vector<2x32xf32>, vector<32x32xf32>, vector<2x32xf32> -> vector<2x32xf32>
    %87 = arith.addf %85, %86 : vector<2x32xf32>
    %88 = math.tanh %87 : vector<2x32xf32>
    %c10_86 = arith.constant 10 : index
    %c0_87 = arith.constant 0 : index
    %89 = vector.load %arg10[%c10_86, %c0_87] : memref<16x32xf32, #tpu.memory_space<vmem>>, vector<2x32xf32>
    tpu.vector_store %arg10[%c10_86, %c0_87], %88 {strides = array<i32>} : memref<16x32xf32, #tpu.memory_space<vmem>>, vector<2x32xf32>,
    %c12_88 = arith.constant 12 : index
    %c0_89 = arith.constant 0 : index
    %90 = vector.load %arg11[%c12_88, %c0_89] : memref<16x32xf32, #tpu.memory_space<vmem>>, vector<2x32xf32>
    %cst_90 = arith.constant dense<0.000000e+00> : vector<2x32xf32>
    %91 = tpu.matmul %88, %58, %cst_90 {dimension_numbers = #tpu.dot_dimension_numbers<[1], [0], [0], [1], [0, 0, 1, 1], [], []>} : vector<2x32xf32>, vector<32x32xf32>, vector<2x32xf32> -> vector<2x32xf32>
    %92 = arith.addf %90, %91 : vector<2x32xf32>
    %93 = math.tanh %92 : vector<2x32xf32>
    %c12_91 = arith.constant 12 : index
    %c0_92 = arith.constant 0 : index
    %94 = vector.load %arg10[%c12_91, %c0_92] : memref<16x32xf32, #tpu.memory_space<vmem>>, vector<2x32xf32>
    tpu.vector_store %arg10[%c12_91, %c0_92], %93 {strides = array<i32>} : memref<16x32xf32, #tpu.memory_space<vmem>>, vector<2x32xf32>,
    %c14_93 = arith.constant 14 : index
    %c0_94 = arith.constant 0 : index
    %95 = vector.load %arg11[%c14_93, %c0_94] : memref<16x32xf32, #tpu.memory_space<vmem>>, vector<2x32xf32>
    %cst_95 = arith.constant dense<0.000000e+00> : vector<2x32xf32>
    %96 = tpu.matmul %93, %58, %cst_95 {dimension_numbers = #tpu.dot_dimension_numbers<[1], [0], [0], [1], [0, 0, 1, 1], [], []>} : vector<2x32xf32>, vector<32x32xf32>, vector<2x32xf32> -> vector<2x32xf32>
    %97 = arith.addf %95, %96 : vector<2x32xf32>
    %98 = math.tanh %97 : vector<2x32xf32>
    %c14_96 = arith.constant 14 : index
    %c0_97 = arith.constant 0 : index
    %99 = vector.load %arg10[%c14_96, %c0_97] : memref<16x32xf32, #tpu.memory_space<vmem>>, vector<2x32xf32>
    tpu.vector_store %arg10[%c14_96, %c0_97], %98 {strides = array<i32>} : memref<16x32xf32, #tpu.memory_space<vmem>>, vector<2x32xf32>,
    %c0_98 = arith.constant 0 : index
    %c0_99 = arith.constant 0 : index
    %100 = vector.load %arg10[%c0_98, %c0_99] : memref<16x32xf32, #tpu.memory_space<vmem>>, vector<16x32xf32>
    %c0_100 = arith.constant 0 : index
    %c0_101 = arith.constant 0 : index
    %101 = vector.load %arg7[%c0_100, %c0_101] : memref<32x128xf32, #tpu.memory_space<vmem>>, vector<32x128xf32>
    %cst_102 = arith.constant dense<0.000000e+00> : vector<16x128xf32>
    %102 = tpu.matmul %100, %101, %cst_102 {dimension_numbers = #tpu.dot_dimension_numbers<[1], [0], [0], [1], [0, 0, 1, 1], [], []>} : vector<16x32xf32>, vector<32x128xf32>, vector<16x128xf32> -> vector<16x128xf32>
    %c0_103 = arith.constant 0 : index
    %c0_104 = arith.constant 0 : index
    %103 = vector.load %arg8[%c0_103, %c0_104] : memref<1x128xf32, #tpu.memory_space<vmem>>, vector<1x128xf32>
    %104 = vector.broadcast %103 : vector<1x128xf32> to vector<16x128xf32>
    %105 = arith.addf %102, %104 : vector<16x128xf32>
    %c0_105 = arith.constant 0 : index
    %c0_106 = arith.constant 0 : index
    %106 = vector.load %arg9[%c0_105, %c0_106] : memref<16x128xf32, #tpu.memory_space<vmem>>, vector<16x128xf32>
    tpu.vector_store %arg9[%c0_105, %c0_106], %105 {strides = array<i32>} : memref<16x128xf32, #tpu.memory_space<vmem>>, vector<16x128xf32>,
    return
  }
}

</mosaic_0001>

<llo_original>
// kernel: tpu_custom_call.1
$region0: #{tpu_custom_call.1}
  #allocation0 [shape = 'u32[]', space=smem, size = 0x4, offset = 0x4, fixed_abs, tag = 'smem constant byte address 0x4 - core index']
  #allocation1 [shape = 'u32[144,128]{1,0:T(1,128)}', space=vmem, size = 0x12000, scoped, tag = 'internal scratch']
  #allocation2 [shape = 'f32[16,32]{1,0:T(8,128)}', space=vmem, size = 0x2000, scoped, tag = 'scratch operand']
  #allocation3 [shape = 'f32[16,32]{1,0:T(8,128)}', space=vmem, size = 0x2000, scoped, tag = 'scratch operand']
  %s0 = inlined_call_operand.vmem [shape: f32[16,512], index: 0, kind: input, shape index: {}]
  %s1 = inlined_call_operand.vmem [shape: f32[512,32], index: 1, kind: input, shape index: {}]
  %s2 = inlined_call_operand.vmem [shape: f32[32,32], index: 2, kind: input, shape index: {}]
  %s3 = inlined_call_operand.vmem [shape: f32[1,32], index: 3, kind: input, shape index: {}]
  %s4 = inlined_call_operand.vmem [shape: f32[32,32], index: 4, kind: input, shape index: {}]
  %s5 = inlined_call_operand.vmem [shape: f32[32,32], index: 5, kind: input, shape index: {}]
  %s6 = inlined_call_operand.vmem [shape: f32[1,32], index: 6, kind: input, shape index: {}]
  %s7 = inlined_call_operand.vmem [shape: f32[32,128], index: 7, kind: input, shape index: {}]
  %s8 = inlined_call_operand.vmem [shape: f32[1,128], index: 8, kind: input, shape index: {}]
  %s9 = inlined_call_operand.hbm [shape: f32[16,128], index: 9, kind: output, shape index: {}]
  %s10 = sld [smem:[#allocation0]]
  $region46: #{tpu_custom_call.1} parent=0
    _
  %s12 = ssub.s32 1, %s10
  %s13 = scalar_select 0, %s12, %s10
  $region1: #{tpu_custom_call.1} parent=0
    #allocation4 [shape = 'u8[8192]{0}', space=vmem, size = 0x2000, scoped, tag = 'output window, operand 0, single buffered']
    #allocation5 [shape = 's32[1]{0}', space=sflag, size = 0x4, scoped, tag = 'scoped memory for tpu_custom_call.1']
    %14 = vsyncpa [#allocation5], 0
    // Predicated region
    $region2: #{tpu_custom_call.1} parent=1 // pred_check
      _
    $region3: #{tpu_custom_call.1} parent=1 // pred_check_branch
      %16 = sbr.rel (0) target = $region5
    $region4: #{tpu_custom_call.1} parent=1 // pred_region
      _
    $region5: #{tpu_custom_call.1} parent=1 // pred_fallthru
      _
    // Predicated region
    $region6: #{tpu_custom_call.1} parent=1 // pred_check
      _
    $region7: #{tpu_custom_call.1} parent=1 // pred_check_branch
      %18 = sbr.rel (0) target = $region9
    $region8: #{tpu_custom_call.1} parent=1 // pred_region
      _
    $region9: #{tpu_custom_call.1} parent=1 // pred_fallthru
      _
    // Predicated region
    $region10: #{tpu_custom_call.1} parent=1 // pred_check
      _
    $region11: #{tpu_custom_call.1} parent=1 // pred_check_branch
      %20 = sbr.rel (0) target = $region13
    $region12: #{tpu_custom_call.1} parent=1 // pred_region
      _
    $region13: #{tpu_custom_call.1} parent=1 // pred_fallthru
      _
    // Predicated region
    $region14: #{tpu_custom_call.1} parent=1 // pred_check
      _
    $region15: #{tpu_custom_call.1} parent=1 // pred_check_branch
      %22 = sbr.rel (0) target = $region17
    $region16: #{tpu_custom_call.1} parent=1 // pred_region
      _
    $region17: #{tpu_custom_call.1} parent=1 // pred_fallthru
      _
    // Predicated region
    $region18: #{tpu_custom_call.1} parent=1 // pred_check
      _
    $region19: #{tpu_custom_call.1} parent=1 // pred_check_branch
      %24 = sbr.rel (0) target = $region21
    $region20: #{tpu_custom_call.1} parent=1 // pred_region
      _
    $region21: #{tpu_custom_call.1} parent=1 // pred_fallthru
      _
    // Predicated region
    $region22: #{tpu_custom_call.1} parent=1 // pred_check
      _
    $region23: #{tpu_custom_call.1} parent=1 // pred_check_branch
      %26 = sbr.rel (0) target = $region25
    $region24: #{tpu_custom_call.1} parent=1 // pred_region
      _
    $region25: #{tpu_custom_call.1} parent=1 // pred_fallthru
      _
    // Predicated region
    $region26: #{tpu_custom_call.1} parent=1 // pred_check
      _
    $region27: #{tpu_custom_call.1} parent=1 // pred_check_branch
      %28 = sbr.rel (0) target = $region29
    $region28: #{tpu_custom_call.1} parent=1 // pred_region
      _
    $region29: #{tpu_custom_call.1} parent=1 // pred_fallthru
      _
    // Predicated region
    $region30: #{tpu_custom_call.1} parent=1 // pred_check
      _
    $region31: #{tpu_custom_call.1} parent=1 // pred_check_branch
      %30 = sbr.rel (0) target = $region33
    $region32: #{tpu_custom_call.1} parent=1 // pred_region
      _
    $region33: #{tpu_custom_call.1} parent=1 // pred_fallthru
      _
    // Predicated region
    $region34: #{tpu_custom_call.1} parent=1 // pred_check
      _
    $region35: #{tpu_custom_call.1} parent=1 // pred_check_branch
      %32 = sbr.rel (0) target = $region37
    $region36: #{tpu_custom_call.1} parent=1 // pred_region
      _
    $region37: #{tpu_custom_call.1} parent=1 // pred_fallthru
      _
    %vm33 = vcmask 261120
    %34 = vst.msk [vmem:[#allocation2] sm:$0xff] %vm33, 0.0
    %35 = vst.msk [vmem:[#allocation2 + $0x8] sm:$0xff] %vm33, 0.0
    %v36 = vld [vmem:[%s0] sm:$0xff]
    %v37 = vld [vmem:[%s0 + $0x8] sm:$0xff]
    %v38 = vld [vmem:[%s0 + $0x10] sm:$0xff]
    %v39 = vld [vmem:[%s0 + $0x18] sm:$0xff]
    %v40 = vld [vmem:[%s0 + $0x20] sm:$0xff]
    %v41 = vld [vmem:[%s0 + $0x28] sm:$0xff]
    %v42 = vld [vmem:[%s0 + $0x30] sm:$0xff]
    %v43 = vld [vmem:[%s0 + $0x38] sm:$0xff]
    %v44 = vld [vmem:[%s1] sm:$0xff]
    %v45 = vld [vmem:[%s1 + $0x8] sm:$0xff]
    %v46 = vld [vmem:[%s1 + $0x10] sm:$0xff]
    %v47 = vld [vmem:[%s1 + $0x18] sm:$0xff]
    %v48 = vld [vmem:[%s1 + $0x20] sm:$0xff]
    %v49 = vld [vmem:[%s1 + $0x28] sm:$0xff]
    %v50 = vld [vmem:[%s1 + $0x30] sm:$0xff]
    %v51 = vld [vmem:[%s1 + $0x38] sm:$0xff]
    %v52 = vld [vmem:[%s1 + $0x40] sm:$0xff]
    %v53 = vld [vmem:[%s1 + $0x48] sm:$0xff]
    %v54 = vld [vmem:[%s1 + $0x50] sm:$0xff]
    %v55 = vld [vmem:[%s1 + $0x58] sm:$0xff]
    %v56 = vld [vmem:[%s1 + $0x60] sm:$0xff]
    %v57 = vld [vmem:[%s1 + $0x68] sm:$0xff]
    %v58 = vld [vmem:[%s1 + $0x70] sm:$0xff]
    %v59 = vld [vmem:[%s1 + $0x78] sm:$0xff]
    %v60 = vld [vmem:[%s1 + $0x80] sm:$0xff]
    %v61 = vld [vmem:[%s1 + $0x88] sm:$0xff]
    %v62 = vld [vmem:[%s1 + $0x90] sm:$0xff]
    %v63 = vld [vmem:[%s1 + $0x98] sm:$0xff]
    %v64 = vld [vmem:[%s1 + $0xa0] sm:$0xff]
    %v65 = vld [vmem:[%s1 + $0xa8] sm:$0xff]
    %v66 = vld [vmem:[%s1 + $0xb0] sm:$0xff]
    %v67 = vld [vmem:[%s1 + $0xb8] sm:$0xff]
    %v68 = vld [vmem:[%s1 + $0xc0] sm:$0xff]
    %v69 = vld [vmem:[%s1 + $0xc8] sm:$0xff]
    %v70 = vld [vmem:[%s1 + $0xd0] sm:$0xff]
    %v71 = vld [vmem:[%s1 + $0xd8] sm:$0xff]
    %v72 = vld [vmem:[%s1 + $0xe0] sm:$0xff]
    %v73 = vld [vmem:[%s1 + $0xe8] sm:$0xff]
    %v74 = vld [vmem:[%s1 + $0xf0] sm:$0xff]
    %v75 = vld [vmem:[%s1 + $0xf8] sm:$0xff]
    %v76 = vld [vmem:[%s1 + $0x100] sm:$0xff]
    %v77 = vld [vmem:[%s1 + $0x108] sm:$0xff]
    %v78 = vld [vmem:[%s1 + $0x110] sm:$0xff]
    %v79 = vld [vmem:[%s1 + $0x118] sm:$0xff]
    %v80 = vld [vmem:[%s1 + $0x120] sm:$0xff]
    %v81 = vld [vmem:[%s1 + $0x128] sm:$0xff]
    %v82 = vld [vmem:[%s1 + $0x130] sm:$0xff]
    %v83 = vld [vmem:[%s1 + $0x138] sm:$0xff]
    %v84 = vld [vmem:[%s1 + $0x140] sm:$0xff]
    %v85 = vld [vmem:[%s1 + $0x148] sm:$0xff]
    %v86 = vld [vmem:[%s1 + $0x150] sm:$0xff]
    %v87 = vld [vmem:[%s1 + $0x158] sm:$0xff]
    %v88 = vld [vmem:[%s1 + $0x160] sm:$0xff]
    %v89 = vld [vmem:[%s1 + $0x168] sm:$0xff]
    %v90 = vld [vmem:[%s1 + $0x170] sm:$0xff]
    %v91 = vld [vmem:[%s1 + $0x178] sm:$0xff]
    %v92 = vld [vmem:[%s1 + $0x180] sm:$0xff]
    %v93 = vld [vmem:[%s1 + $0x188] sm:$0xff]
    %v94 = vld [vmem:[%s1 + $0x190] sm:$0xff]
    %v95 = vld [vmem:[%s1 + $0x198] sm:$0xff]
    %v96 = vld [vmem:[%s1 + $0x1a0] sm:$0xff]
    %v97 = vld [vmem:[%s1 + $0x1a8] sm:$0xff]
    %v98 = vld [vmem:[%s1 + $0x1b0] sm:$0xff]
    %v99 = vld [vmem:[%s1 + $0x1b8] sm:$0xff]
    %v100 = vld [vmem:[%s1 + $0x1c0] sm:$0xff]
    %v101 = vld [vmem:[%s1 + $0x1c8] sm:$0xff]
    %v102 = vld [vmem:[%s1 + $0x1d0] sm:$0xff]
    %v103 = vld [vmem:[%s1 + $0x1d8] sm:$0xff]
    %v104 = vld [vmem:[%s1 + $0x1e0] sm:$0xff]
    %v105 = vld [vmem:[%s1 + $0x1e8] sm:$0xff]
    %v106 = vld [vmem:[%s1 + $0x1f0] sm:$0xff]
    %v107 = vld [vmem:[%s1 + $0x1f8] sm:$0xff]
    %v108 = vld [vmem:[%s3] sm:$0x1]
    %v110 = vlaneseq
    %v111 = vshrl.u32 %v110, 7
    %v112 = vsub.s32 0, %v111
    %v113 = vrot.slane %v108, %v112
    %115 = vmatprep.subr.mxu0 0.0
    %116 = vmatpush1.msra.mxu0 %v44
    %117 = vmatprep.subr.mxu0 0.0
    %118 = vmatpush1.msra.mxu0 %v45
    %119 = vmatprep.subr.mxu0 0.0
    %120 = vmatpush1.msra.mxu0 %v46
    %121 = vmatprep.subr.mxu0 0.0
    %122 = vmatpush1.msra.mxu0 %v47
    %123 = vmatprep.subr.mxu0 0.0
    %124 = vmatpush1.msra.mxu0 %v48
    %125 = vmatprep.subr.mxu0 0.0
    %126 = vmatpush1.msra.mxu0 %v49
    %127 = vmatprep.subr.mxu0 0.0
    %128 = vmatpush1.msra.mxu0 %v50
    %129 = vmatprep.subr.mxu0 0.0
    %130 = vmatpush1.msra.mxu0 %v51
    %131 = vmatprep.subr.mxu0 0.0
    %132 = vmatpush1.msra.mxu0 %v52
    %133 = vmatprep.subr.mxu0 0.0
    %134 = vmatpush1.msra.mxu0 %v53
    %135 = vmatprep.subr.mxu0 0.0
    %136 = vmatpush1.msra.mxu0 %v54
    %137 = vmatprep.subr.mxu0 0.0
    %138 = vmatpush1.msra.mxu0 %v55
    %139 = vmatprep.subr.mxu0 0.0
    %140 = vmatpush1.msra.mxu0 %v56
    %141 = vmatprep.subr.mxu0 0.0
    %142 = vmatpush1.msra.mxu0 %v57
    %143 = vmatprep.subr.mxu0 0.0
    %144 = vmatpush1.msra.mxu0 %v58
    %145 = vmatprep.subr.mxu0 0.0
    %146 = vmatpush1.msra.mxu0 %v59
    %147 = vmatprep.subr.mxu0 0.0
    %148 = vmatpush1.msra.mxu0 %v60
    %149 = vmatprep.subr.mxu0 0.0
    %150 = vmatpush1.msra.mxu0 %v61
    %151 = vmatprep.subr.mxu0 0.0
    %152 = vmatpush1.msra.mxu0 %v62
    %153 = vmatprep.subr.mxu0 0.0
    %154 = vmatpush1.msra.mxu0 %v63
    %155 = vmatprep.subr.mxu0 0.0
    %156 = vmatpush1.msra.mxu0 %v64
    %157 = vmatprep.subr.mxu0 0.0
    %158 = vmatpush1.msra.mxu0 %v65
    %159 = vmatprep.subr.mxu0 0.0
    %160 = vmatpush1.msra.mxu0 %v66
    %161 = vmatprep.subr.mxu0 0.0
    %162 = vmatpush1.msra.mxu0 %v67
    %163 = vmatprep.subr.mxu0 0.0
    %164 = vmatpush1.msra.mxu0 %v68
    %165 = vmatprep.subr.mxu0 0.0
    %166 = vmatpush1.msra.mxu0 %v69
    %167 = vmatprep.subr.mxu0 0.0
    %168 = vmatpush1.msra.mxu0 %v70
    %169 = vmatprep.subr.mxu0 0.0
    %170 = vmatpush1.msra.mxu0 %v71
    %171 = vmatprep.subr.mxu0 0.0
    %172 = vmatpush1.msra.mxu0 %v72
    %173 = vmatprep.subr.mxu0 0.0
    %174 = vmatpush1.msra.mxu0 %v73
    %175 = vmatprep.subr.mxu0 0.0
    %176 = vmatpush1.msra.mxu0 %v74
    %177 = vmatprep.subr.mxu0 0.0
    %178 = vmatpush1.msra.mxu0 %v75
    %179 = vmatprep.mubr.f32.mxu0 %v37
    %180 = vmatmul.mubr.f32.gmra.mrb[0].mxu0 %v36
    %v181 = vpop.f32.mrb[0].mxu0
    %v182 = vadd.f32 %v113, %v181
    %v183 = vpop.f32.mrb[0].mxu0
    %184 = vmatprep.mubr.f32.mxu0 %v41
    %185 = vmatmul.mubr.f32.gmra.mrb[0].mxu0 %v40
    %v186 = vpop.f32.mrb[0].mxu0
    %v187 = vadd.f32 %v113, %v186
    %v188 = vpop.f32.mrb[0].mxu0
    %189 = vdwg.mxu0
    %190 = vmatprep.subr.mxu0 0.0
    %191 = vmatpush1.msra.mxu0 %v76
    %192 = vmatprep.subr.mxu0 0.0
    %193 = vmatpush1.msra.mxu0 %v77
    %194 = vmatprep.subr.mxu0 0.0
    %195 = vmatpush1.msra.mxu0 %v78
    %196 = vmatprep.subr.mxu0 0.0
    %197 = vmatpush1.msra.mxu0 %v79
    %198 = vmatprep.subr.mxu0 0.0
    %199 = vmatpush1.msra.mxu0 %v80
    %200 = vmatprep.subr.mxu0 0.0
    %201 = vmatpush1.msra.mxu0 %v81
    %202 = vmatprep.subr.mxu0 0.0
    %203 = vmatpush1.msra.mxu0 %v82
    %204 = vmatprep.subr.mxu0 0.0
    %205 = vmatpush1.msra.mxu0 %v83
    %206 = vmatprep.subr.mxu0 0.0
    %207 = vmatpush1.msra.mxu0 %v84
    %208 = vmatprep.subr.mxu0 0.0
    %209 = vmatpush1.msra.mxu0 %v85
    %210 = vmatprep.subr.mxu0 0.0
    %211 = vmatpush1.msra.mxu0 %v86
    %212 = vmatprep.subr.mxu0 0.0
    %213 = vmatpush1.msra.mxu0 %v87
    %214 = vmatprep.subr.mxu0 0.0
    %215 = vmatpush1.msra.mxu0 %v88
    %216 = vmatprep.subr.mxu0 0.0
    %217 = vmatpush1.msra.mxu0 %v89
    %218 = vmatprep.subr.mxu0 0.0
    %219 = vmatpush1.msra.mxu0 %v90
    %220 = vmatprep.subr.mxu0 0.0
    %221 = vmatpush1.msra.mxu0 %v91
    %222 = vmatprep.subr.mxu0 0.0
    %223 = vmatpush1.msra.mxu0 %v92
    %224 = vmatprep.subr.mxu0 0.0
    %225 = vmatpush1.msra.mxu0 %v93
    %226 = vmatprep.subr.mxu0 0.0
    %227 = vmatpush1.msra.mxu0 %v94
    %228 = vmatprep.subr.mxu0 0.0
    %229 = vmatpush1.msra.mxu0 %v95
    %230 = vmatprep.subr.mxu0 0.0
    %231 = vmatpush1.msra.mxu0 %v96
    %232 = vmatprep.subr.mxu0 0.0
    %233 = vmatpush1.msra.mxu0 %v97
    %234 = vmatprep.subr.mxu0 0.0
    %235 = vmatpush1.msra.mxu0 %v98
    %236 = vmatprep.subr.mxu0 0.0
    %237 = vmatpush1.msra.mxu0 %v99
    %238 = vmatprep.subr.mxu0 0.0
    %239 = vmatpush1.msra.mxu0 %v100
    %240 = vmatprep.subr.mxu0 0.0
    %241 = vmatpush1.msra.mxu0 %v101
    %242 = vmatprep.subr.mxu0 0.0
    %243 = vmatpush1.msra.mxu0 %v102
    %244 = vmatprep.subr.mxu0 0.0
    %245 = vmatpush1.msra.mxu0 %v103
    %246 = vmatprep.subr.mxu0 0.0
    %247 = vmatpush1.msra.mxu0 %v104
    %248 = vmatprep.subr.mxu0 0.0
    %249 = vmatpush1.msra.mxu0 %v105
    %250 = vmatprep.subr.mxu0 0.0
    %251 = vmatpush1.msra.mxu0 %v106
    %252 = vmatprep.subr.mxu0 0.0
    %253 = vmatpush1.msra.mxu0 %v107
    %254 = vmatprep.mubr.f32.mxu0 %v39
    %255 = vmatmul.mubr.f32.gmra.mrb[0].mxu0 %v38
    %v256 = vpop.f32.mrb[0].mxu0
    %v257 = vadd.f32 %v182, %v256
    %v258 = vpop.f32.mrb[0].mxu0
    %259 = vmatprep.mubr.f32.mxu0 %v43
    %260 = vmatmul.mubr.f32.gmra.mrb[0].mxu0 %v42
    %v261 = vpop.f32.mrb[0].mxu0
    %v262 = vadd.f32 %v187, %v261
    %v263 = vpop.f32.mrb[0].mxu0
    %264 = vdwg.mxu0
    %265 = vst.msk [vmem:[#allocation3] sm:$0xff] %vm33, %v257
    %266 = vst.msk [vmem:[#allocation3 + $0x8] sm:$0xff] %vm33, %v262
    %v267 = vld [vmem:[%s2] sm:$0xff]
    %v268 = vld [vmem:[%s2 + $0x8] sm:$0xff]
    %v269 = vld [vmem:[%s2 + $0x10] sm:$0xff]
    %v270 = vld [vmem:[%s2 + $0x18] sm:$0xff]
    %v271 = vld [vmem:[#allocation3] sm:$0x3]
    %v273 = vsel %vm33, 0.0, 0
    %275 = vmatprep.subr.mxu0 0.0
    %276 = vmatpush1.msra.mxu0 %v267
    %277 = vmatprep.subr.mxu0 0.0
    %278 = vmatpush1.msra.mxu0 %v268
    %279 = vmatprep.subr.mxu0 0.0
    %280 = vmatpush1.msra.mxu0 %v269
    %281 = vmatprep.subr.mxu0 0.0
    %282 = vmatpush1.msra.mxu0 %v270
    %283 = vmatprep.subr.mxu0 0.0
    %284 = vmatpush1.msra.mxu0 0.0
    %285 = vmatprep.subr.mxu0 0.0
    %286 = vmatpush1.msra.mxu0 0.0
    %287 = vmatprep.subr.mxu0 0.0
    %288 = vmatpush1.msra.mxu0 0.0
    %289 = vmatprep.subr.mxu0 0.0
    %290 = vmatpush1.msra.mxu0 0.0
    %291 = vmatprep.subr.mxu0 0.0
    %292 = vmatpush1.msra.mxu0 0.0
    %293 = vmatprep.subr.mxu0 0.0
    %294 = vmatpush1.msra.mxu0 0.0
    %295 = vmatprep.subr.mxu0 0.0
    %296 = vmatpush1.msra.mxu0 0.0
    %297 = vmatprep.subr.mxu0 0.0
    %298 = vmatpush1.msra.mxu0 0.0
    %299 = vmatprep.subr.mxu0 0.0
    %300 = vmatpush1.msra.mxu0 0.0
    %301 = vmatprep.subr.mxu0 0.0
    %302 = vmatpush1.msra.mxu0 0.0
    %303 = vmatprep.subr.mxu0 0.0
    %304 = vmatpush1.msra.mxu0 0.0
    %305 = vmatprep.subr.mxu0 0.0
    %306 = vmatpush1.msra.mxu0 0.0
    %307 = vmatprep.subr.mxu0 0.0
    %308 = vmatpush1.msra.mxu0 0.0
    %309 = vmatprep.subr.mxu0 0.0
    %310 = vmatpush1.msra.mxu0 0.0
    %311 = vmatprep.subr.mxu0 0.0
    %312 = vmatpush1.msra.mxu0 0.0
    %313 = vmatprep.subr.mxu0 0.0
    %314 = vmatpush1.msra.mxu0 0.0
    %315 = vmatprep.subr.mxu0 0.0
    %316 = vmatpush1.msra.mxu0 0.0
    %317 = vmatprep.subr.mxu0 0.0
    %318 = vmatpush1.msra.mxu0 0.0
    %319 = vmatprep.subr.mxu0 0.0
    %320 = vmatpush1.msra.mxu0 0.0
    %321 = vmatprep.subr.mxu0 0.0
    %322 = vmatpush1.msra.mxu0 0.0
    %323 = vmatprep.subr.mxu0 0.0
    %324 = vmatpush1.msra.mxu0 0.0
    %325 = vmatprep.subr.mxu0 0.0
    %326 = vmatpush1.msra.mxu0 0.0
    %327 = vmatprep.subr.mxu0 0.0
    %328 = vmatpush1.msra.mxu0 0.0
    %329 = vmatprep.subr.mxu0 0.0
    %330 = vmatpush1.msra.mxu0 0.0
    %331 = vmatprep.subr.mxu0 0.0
    %332 = vmatpush1.msra.mxu0 0.0
    %333 = vmatprep.subr.mxu0 0.0
    %334 = vmatpush1.msra.mxu0 0.0
    %335 = vmatprep.subr.mxu0 0.0
    %336 = vmatpush1.msra.mxu0 0.0
    %337 = vmatprep.subr.mxu0 0.0
    %338 = vmatpush1.msra.mxu0 0.0
    %339 = vmatprep.mubr.f32.mxu0 0.0
    %340 = vmatmul.mubr.f32.gmra.mrb[0].mxu0 %v273
    %v341 = vpop.f32.mrb[0].mxu0
    %v342 = vadd.f32 0.0, %v341
    %v343 = vpop.f32.mrb[0].mxu0
    %344 = vdwg.mxu0
    %v345 = vadd.f32 %v271, %v342
    %v346 = vtanh.pop %v345
    %vm347 = vcmask 254976
    %348 = vst.msk [vmem:[#allocation2] sm:$0x3] %vm347, %v346
    %v349 = vld [vmem:[#allocation3 + $0x2] sm:$0x3]
    %v351 = vsel %vm33, %v346, 0
    %353 = vmatprep.subr.mxu0 0.0
    %354 = vmatpush1.msra.mxu0 %v267
    %355 = vmatprep.subr.mxu0 0.0
    %356 = vmatpush1.msra.mxu0 %v268
    %357 = vmatprep.subr.mxu0 0.0
    %358 = vmatpush1.msra.mxu0 %v269
    %359 = vmatprep.subr.mxu0 0.0
    %360 = vmatpush1.msra.mxu0 %v270
    %361 = vmatprep.subr.mxu0 0.0
    %362 = vmatpush1.msra.mxu0 0.0
    %363 = vmatprep.subr.mxu0 0.0
    %364 = vmatpush1.msra.mxu0 0.0
    %365 = vmatprep.subr.mxu0 0.0
    %366 = vmatpush1.msra.mxu0 0.0
    %367 = vmatprep.subr.mxu0 0.0
    %368 = vmatpush1.msra.mxu0 0.0
    %369 = vmatprep.subr.mxu0 0.0
    %370 = vmatpush1.msra.mxu0 0.0
    %371 = vmatprep.subr.mxu0 0.0
    %372 = vmatpush1.msra.mxu0 0.0
    %373 = vmatprep.subr.mxu0 0.0
    %374 = vmatpush1.msra.mxu0 0.0
    %375 = vmatprep.subr.mxu0 0.0
    %376 = vmatpush1.msra.mxu0 0.0
    %377 = vmatprep.subr.mxu0 0.0
    %378 = vmatpush1.msra.mxu0 0.0
    %379 = vmatprep.subr.mxu0 0.0
    %380 = vmatpush1.msra.mxu0 0.0
    %381 = vmatprep.subr.mxu0 0.0
    %382 = vmatpush1.msra.mxu0 0.0
    %383 = vmatprep.subr.mxu0 0.0
    %384 = vmatpush1.msra.mxu0 0.0
    %385 = vmatprep.subr.mxu0 0.0
    %386 = vmatpush1.msra.mxu0 0.0
    %387 = vmatprep.subr.mxu0 0.0
    %388 = vmatpush1.msra.mxu0 0.0
    %389 = vmatprep.subr.mxu0 0.0
    %390 = vmatpush1.msra.mxu0 0.0
    %391 = vmatprep.subr.mxu0 0.0
    %392 = vmatpush1.msra.mxu0 0.0
    %393 = vmatprep.subr.mxu0 0.0
    %394 = vmatpush1.msra.mxu0 0.0
    %395 = vmatprep.subr.mxu0 0.0
    %396 = vmatpush1.msra.mxu0 0.0
    %397 = vmatprep.subr.mxu0 0.0
    %398 = vmatpush1.msra.mxu0 0.0
    %399 = vmatprep.subr.mxu0 0.0
    %400 = vmatpush1.msra.mxu0 0.0
    %401 = vmatprep.subr.mxu0 0.0
    %402 = vmatpush1.msra.mxu0 0.0
    %403 = vmatprep.subr.mxu0 0.0
    %404 = vmatpush1.msra.mxu0 0.0
    %405 = vmatprep.subr.mxu0 0.0
    %406 = vmatpush1.msra.mxu0 0.0
    %407 = vmatprep.subr.mxu0 0.0
    %408 = vmatpush1.msra.mxu0 0.0
    %409 = vmatprep.subr.mxu0 0.0
    %410 = vmatpush1.msra.mxu0 0.0
    %411 = vmatprep.subr.mxu0 0.0
    %412 = vmatpush1.msra.mxu0 0.0
    %413 = vmatprep.subr.mxu0 0.0
    %414 = vmatpush1.msra.mxu0 0.0
    %415 = vmatprep.subr.mxu0 0.0
    %416 = vmatpush1.msra.mxu0 0.0
    %417 = vmatprep.mubr.f32.mxu0 0.0
    %418 = vmatmul.mubr.f32.gmra.mrb[0].mxu0 %v351
    %v419 = vpop.f32.mrb[0].mxu0
    %v420 = vadd.f32 0.0, %v419
    %v421 = vpop.f32.mrb[0].mxu0
    %422 = vdwg.mxu0
    %v423 = vadd.f32 %v349, %v420
    %v424 = vtanh.pop %v423
    %425 = vst.msk [vmem:[#allocation2 + $0x2] sm:$0x3] %vm347, %v424
    %v426 = vld [vmem:[#allocation3 + $0x4] sm:$0x3]
    %v428 = vsel %vm33, %v424, 0
    %430 = vmatprep.subr.mxu0 0.0
    %431 = vmatpush1.msra.mxu0 %v267
    %432 = vmatprep.subr.mxu0 0.0
    %433 = vmatpush1.msra.mxu0 %v268
    %434 = vmatprep.subr.mxu0 0.0
    %435 = vmatpush1.msra.mxu0 %v269
    %436 = vmatprep.subr.mxu0 0.0
    %437 = vmatpush1.msra.mxu0 %v270
    %438 = vmatprep.subr.mxu0 0.0
    %439 = vmatpush1.msra.mxu0 0.0
    %440 = vmatprep.subr.mxu0 0.0
    %441 = vmatpush1.msra.mxu0 0.0
    %442 = vmatprep.subr.mxu0 0.0
    %443 = vmatpush1.msra.mxu0 0.0
    %444 = vmatprep.subr.mxu0 0.0
    %445 = vmatpush1.msra.mxu0 0.0
    %446 = vmatprep.subr.mxu0 0.0
    %447 = vmatpush1.msra.mxu0 0.0
    %448 = vmatprep.subr.mxu0 0.0
    %449 = vmatpush1.msra.mxu0 0.0
    %450 = vmatprep.subr.mxu0 0.0
    %451 = vmatpush1.msra.mxu0 0.0
    %452 = vmatprep.subr.mxu0 0.0
    %453 = vmatpush1.msra.mxu0 0.0
    %454 = vmatprep.subr.mxu0 0.0
    %455 = vmatpush1.msra.mxu0 0.0
    %456 = vmatprep.subr.mxu0 0.0
    %457 = vmatpush1.msra.mxu0 0.0
    %458 = vmatprep.subr.mxu0 0.0
    %459 = vmatpush1.msra.mxu0 0.0
    %460 = vmatprep.subr.mxu0 0.0
    %461 = vmatpush1.msra.mxu0 0.0
    %462 = vmatprep.subr.mxu0 0.0
    %463 = vmatpush1.msra.mxu0 0.0
    %464 = vmatprep.subr.mxu0 0.0
    %465 = vmatpush1.msra.mxu0 0.0
    %466 = vmatprep.subr.mxu0 0.0
    %467 = vmatpush1.msra.mxu0 0.0
    %468 = vmatprep.subr.mxu0 0.0
    %469 = vmatpush1.msra.mxu0 0.0
    %470 = vmatprep.subr.mxu0 0.0
    %471 = vmatpush1.msra.mxu0 0.0
    %472 = vmatprep.subr.mxu0 0.0
    %473 = vmatpush1.msra.mxu0 0.0
    %474 = vmatprep.subr.mxu0 0.0
    %475 = vmatpush1.msra.mxu0 0.0
    %476 = vmatprep.subr.mxu0 0.0
    %477 = vmatpush1.msra.mxu0 0.0
    %478 = vmatprep.subr.mxu0 0.0
    %479 = vmatpush1.msra.mxu0 0.0
    %480 = vmatprep.subr.mxu0 0.0
    %481 = vmatpush1.msra.mxu0 0.0
    %482 = vmatprep.subr.mxu0 0.0
    %483 = vmatpush1.msra.mxu0 0.0
    %484 = vmatprep.subr.mxu0 0.0
    %485 = vmatpush1.msra.mxu0 0.0
    %486 = vmatprep.subr.mxu0 0.0
    %487 = vmatpush1.msra.mxu0 0.0
    %488 = vmatprep.subr.mxu0 0.0
    %489 = vmatpush1.msra.mxu0 0.0
    %490 = vmatprep.subr.mxu0 0.0
    %491 = vmatpush1.msra.mxu0 0.0
    %492 = vmatprep.subr.mxu0 0.0
    %493 = vmatpush1.msra.mxu0 0.0
    %494 = vmatprep.mubr.f32.mxu0 0.0
    %495 = vmatmul.mubr.f32.gmra.mrb[0].mxu0 %v428
    %v496 = vpop.f32.mrb[0].mxu0
    %v497 = vadd.f32 0.0, %v496
    %v498 = vpop.f32.mrb[0].mxu0
    %499 = vdwg.mxu0
    %v500 = vadd.f32 %v426, %v497
    %v501 = vtanh.pop %v500
    %502 = vst.msk [vmem:[#allocation2 + $0x4] sm:$0x3] %vm347, %v501
    %v503 = vld [vmem:[#allocation3 + $0x6] sm:$0x3]
    %v505 = vsel %vm33, %v501, 0
    %507 = vmatprep.subr.mxu0 0.0
    %508 = vmatpush1.msra.mxu0 %v267
    %509 = vmatprep.subr.mxu0 0.0
    %510 = vmatpush1.msra.mxu0 %v268
    %511 = vmatprep.subr.mxu0 0.0
    %512 = vmatpush1.msra.mxu0 %v269
    %513 = vmatprep.subr.mxu0 0.0
    %514 = vmatpush1.msra.mxu0 %v270
    %515 = vmatprep.subr.mxu0 0.0
    %516 = vmatpush1.msra.mxu0 0.0
    %517 = vmatprep.subr.mxu0 0.0
    %518 = vmatpush1.msra.mxu0 0.0
    %519 = vmatprep.subr.mxu0 0.0
    %520 = vmatpush1.msra.mxu0 0.0
    %521 = vmatprep.subr.mxu0 0.0
    %522 = vmatpush1.msra.mxu0 0.0
    %523 = vmatprep.subr.mxu0 0.0
    %524 = vmatpush1.msra.mxu0 0.0
    %525 = vmatprep.subr.mxu0 0.0
    %526 = vmatpush1.msra.mxu0 0.0
    %527 = vmatprep.subr.mxu0 0.0
    %528 = vmatpush1.msra.mxu0 0.0
    %529 = vmatprep.subr.mxu0 0.0
    %530 = vmatpush1.msra.mxu0 0.0
    %531 = vmatprep.subr.mxu0 0.0
    %532 = vmatpush1.msra.mxu0 0.0
    %533 = vmatprep.subr.mxu0 0.0
    %534 = vmatpush1.msra.mxu0 0.0
    %535 = vmatprep.subr.mxu0 0.0
    %536 = vmatpush1.msra.mxu0 0.0
    %537 = vmatprep.subr.mxu0 0.0
    %538 = vmatpush1.msra.mxu0 0.0
    %539 = vmatprep.subr.mxu0 0.0
    %540 = vmatpush1.msra.mxu0 0.0
    %541 = vmatprep.subr.mxu0 0.0
    %542 = vmatpush1.msra.mxu0 0.0
    %543 = vmatprep.subr.mxu0 0.0
    %544 = vmatpush1.msra.mxu0 0.0
    %545 = vmatprep.subr.mxu0 0.0
    %546 = vmatpush1.msra.mxu0 0.0
    %547 = vmatprep.subr.mxu0 0.0
    %548 = vmatpush1.msra.mxu0 0.0
    %549 = vmatprep.subr.mxu0 0.0
    %550 = vmatpush1.msra.mxu0 0.0
    %551 = vmatprep.subr.mxu0 0.0
    %552 = vmatpush1.msra.mxu0 0.0
    %553 = vmatprep.subr.mxu0 0.0
    %554 = vmatpush1.msra.mxu0 0.0
    %555 = vmatprep.subr.mxu0 0.0
    %556 = vmatpush1.msra.mxu0 0.0
    %557 = vmatprep.subr.mxu0 0.0
    %558 = vmatpush1.msra.mxu0 0.0
    %559 = vmatprep.subr.mxu0 0.0
    %560 = vmatpush1.msra.mxu0 0.0
    %561 = vmatprep.subr.mxu0 0.0
    %562 = vmatpush1.msra.mxu0 0.0
    %563 = vmatprep.subr.mxu0 0.0
    %564 = vmatpush1.msra.mxu0 0.0
    %565 = vmatprep.subr.mxu0 0.0
    %566 = vmatpush1.msra.mxu0 0.0
    %567 = vmatprep.subr.mxu0 0.0
    %568 = vmatpush1.msra.mxu0 0.0
    %569 = vmatprep.subr.mxu0 0.0
    %570 = vmatpush1.msra.mxu0 0.0
    %571 = vmatprep.mubr.f32.mxu0 0.0
    %572 = vmatmul.mubr.f32.gmra.mrb[0].mxu0 %v505
    %v573 = vpop.f32.mrb[0].mxu0
    %v574 = vadd.f32 0.0, %v573
    %v575 = vpop.f32.mrb[0].mxu0
    %576 = vdwg.mxu0
    %v577 = vadd.f32 %v503, %v574
    %v578 = vtanh.pop %v577
    %579 = vst.msk [vmem:[#allocation2 + $0x6] sm:$0x3] %vm347, %v578
    %v580 = vld [vmem:[#allocation3 + $0x8] sm:$0x3]
    %v582 = vsel %vm33, %v578, 0
    %584 = vmatprep.subr.mxu0 0.0
    %585 = vmatpush1.msra.mxu0 %v267
    %586 = vmatprep.subr.mxu0 0.0
    %587 = vmatpush1.msra.mxu0 %v268
    %588 = vmatprep.subr.mxu0 0.0
    %589 = vmatpush1.msra.mxu0 %v269
    %590 = vmatprep.subr.mxu0 0.0
    %591 = vmatpush1.msra.mxu0 %v270
    %592 = vmatprep.subr.mxu0 0.0
    %593 = vmatpush1.msra.mxu0 0.0
    %594 = vmatprep.subr.mxu0 0.0
    %595 = vmatpush1.msra.mxu0 0.0
    %596 = vmatprep.subr.mxu0 0.0
    %597 = vmatpush1.msra.mxu0 0.0
    %598 = vmatprep.subr.mxu0 0.0
    %599 = vmatpush1.msra.mxu0 0.0
    %600 = vmatprep.subr.mxu0 0.0
    %601 = vmatpush1.msra.mxu0 0.0
    %602 = vmatprep.subr.mxu0 0.0
    %603 = vmatpush1.msra.mxu0 0.0
    %604 = vmatprep.subr.mxu0 0.0
    %605 = vmatpush1.msra.mxu0 0.0
    %606 = vmatprep.subr.mxu0 0.0
    %607 = vmatpush1.msra.mxu0 0.0
    %608 = vmatprep.subr.mxu0 0.0
    %609 = vmatpush1.msra.mxu0 0.0
    %610 = vmatprep.subr.mxu0 0.0
    %611 = vmatpush1.msra.mxu0 0.0
    %612 = vmatprep.subr.mxu0 0.0
    %613 = vmatpush1.msra.mxu0 0.0
    %614 = vmatprep.subr.mxu0 0.0
    %615 = vmatpush1.msra.mxu0 0.0
    %616 = vmatprep.subr.mxu0 0.0
    %617 = vmatpush1.msra.mxu0 0.0
    %618 = vmatprep.subr.mxu0 0.0
    %619 = vmatpush1.msra.mxu0 0.0
    %620 = vmatprep.subr.mxu0 0.0
    %621 = vmatpush1.msra.mxu0 0.0
    %622 = vmatprep.subr.mxu0 0.0
    %623 = vmatpush1.msra.mxu0 0.0
    %624 = vmatprep.subr.mxu0 0.0
    %625 = vmatpush1.msra.mxu0 0.0
    %626 = vmatprep.subr.mxu0 0.0
    %627 = vmatpush1.msra.mxu0 0.0
    %628 = vmatprep.subr.mxu0 0.0
    %629 = vmatpush1.msra.mxu0 0.0
    %630 = vmatprep.subr.mxu0 0.0
    %631 = vmatpush1.msra.mxu0 0.0
    %632 = vmatprep.subr.mxu0 0.0
    %633 = vmatpush1.msra.mxu0 0.0
    %634 = vmatprep.subr.mxu0 0.0
    %635 = vmatpush1.msra.mxu0 0.0
    %636 = vmatprep.subr.mxu0 0.0
    %637 = vmatpush1.msra.mxu0 0.0
    %638 = vmatprep.subr.mxu0 0.0
    %639 = vmatpush1.msra.mxu0 0.0
    %640 = vmatprep.subr.mxu0 0.0
    %641 = vmatpush1.msra.mxu0 0.0
    %642 = vmatprep.subr.mxu0 0.0
    %643 = vmatpush1.msra.mxu0 0.0
    %644 = vmatprep.subr.mxu0 0.0
    %645 = vmatpush1.msra.mxu0 0.0
    %646 = vmatprep.subr.mxu0 0.0
    %647 = vmatpush1.msra.mxu0 0.0
    %648 = vmatprep.mubr.f32.mxu0 0.0
    %649 = vmatmul.mubr.f32.gmra.mrb[0].mxu0 %v582
    %v650 = vpop.f32.mrb[0].mxu0
    %v651 = vadd.f32 0.0, %v650
    %v652 = vpop.f32.mrb[0].mxu0
    %653 = vdwg.mxu0
    %v654 = vadd.f32 %v580, %v651
    %v655 = vtanh.pop %v654
    %656 = vst.msk [vmem:[#allocation2 + $0x8] sm:$0x3] %vm347, %v655
    %v657 = vld [vmem:[#allocation3 + $0xa] sm:$0x3]
    %v659 = vsel %vm33, %v655, 0
    %661 = vmatprep.subr.mxu0 0.0
    %662 = vmatpush1.msra.mxu0 %v267
    %663 = vmatprep.subr.mxu0 0.0
    %664 = vmatpush1.msra.mxu0 %v268
    %665 = vmatprep.subr.mxu0 0.0
    %666 = vmatpush1.msra.mxu0 %v269
    %667 = vmatprep.subr.mxu0 0.0
    %668 = vmatpush1.msra.mxu0 %v270
    %669 = vmatprep.subr.mxu0 0.0
    %670 = vmatpush1.msra.mxu0 0.0
    %671 = vmatprep.subr.mxu0 0.0
    %672 = vmatpush1.msra.mxu0 0.0
    %673 = vmatprep.subr.mxu0 0.0
    %674 = vmatpush1.msra.mxu0 0.0
    %675 = vmatprep.subr.mxu0 0.0
    %676 = vmatpush1.msra.mxu0 0.0
    %677 = vmatprep.subr.mxu0 0.0
    %678 = vmatpush1.msra.mxu0 0.0
    %679 = vmatprep.subr.mxu0 0.0
    %680 = vmatpush1.msra.mxu0 0.0
    %681 = vmatprep.subr.mxu0 0.0
    %682 = vmatpush1.msra.mxu0 0.0
    %683 = vmatprep.subr.mxu0 0.0
    %684 = vmatpush1.msra.mxu0 0.0
    %685 = vmatprep.subr.mxu0 0.0
    %686 = vmatpush1.msra.mxu0 0.0
    %687 = vmatprep.subr.mxu0 0.0
    %688 = vmatpush1.msra.mxu0 0.0
    %689 = vmatprep.subr.mxu0 0.0
    %690 = vmatpush1.msra.mxu0 0.0
    %691 = vmatprep.subr.mxu0 0.0
    %692 = vmatpush1.msra.mxu0 0.0
    %693 = vmatprep.subr.mxu0 0.0
    %694 = vmatpush1.msra.mxu0 0.0
    %695 = vmatprep.subr.mxu0 0.0
    %696 = vmatpush1.msra.mxu0 0.0
    %697 = vmatprep.subr.mxu0 0.0
    %698 = vmatpush1.msra.mxu0 0.0
    %699 = vmatprep.subr.mxu0 0.0
    %700 = vmatpush1.msra.mxu0 0.0
    %701 = vmatprep.subr.mxu0 0.0
    %702 = vmatpush1.msra.mxu0 0.0
    %703 = vmatprep.subr.mxu0 0.0
    %704 = vmatpush1.msra.mxu0 0.0
    %705 = vmatprep.subr.mxu0 0.0
    %706 = vmatpush1.msra.mxu0 0.0
    %707 = vmatprep.subr.mxu0 0.0
    %708 = vmatpush1.msra.mxu0 0.0
    %709 = vmatprep.subr.mxu0 0.0
    %710 = vmatpush1.msra.mxu0 0.0
    %711 = vmatprep.subr.mxu0 0.0
    %712 = vmatpush1.msra.mxu0 0.0
    %713 = vmatprep.subr.mxu0 0.0
    %714 = vmatpush1.msra.mxu0 0.0
    %715 = vmatprep.subr.mxu0 0.0
    %716 = vmatpush1.msra.mxu0 0.0
    %717 = vmatprep.subr.mxu0 0.0
    %718 = vmatpush1.msra.mxu0 0.0
    %719 = vmatprep.subr.mxu0 0.0
    %720 = vmatpush1.msra.mxu0 0.0
    %721 = vmatprep.subr.mxu0 0.0
    %722 = vmatpush1.msra.mxu0 0.0
    %723 = vmatprep.subr.mxu0 0.0
    %724 = vmatpush1.msra.mxu0 0.0
    %725 = vmatprep.mubr.f32.mxu0 0.0
    %726 = vmatmul.mubr.f32.gmra.mrb[0].mxu0 %v659
    %v727 = vpop.f32.mrb[0].mxu0
    %v728 = vadd.f32 0.0, %v727
    %v729 = vpop.f32.mrb[0].mxu0
    %730 = vdwg.mxu0
    %v731 = vadd.f32 %v657, %v728
    %v732 = vtanh.pop %v731
    %733 = vst.msk [vmem:[#allocation2 + $0xa] sm:$0x3] %vm347, %v732
    %v734 = vld [vmem:[#allocation3 + $0xc] sm:$0x3]
    %v736 = vsel %vm33, %v732, 0
    %738 = vmatprep.subr.mxu0 0.0
    %739 = vmatpush1.msra.mxu0 %v267
    %740 = vmatprep.subr.mxu0 0.0
    %741 = vmatpush1.msra.mxu0 %v268
    %742 = vmatprep.subr.mxu0 0.0
    %743 = vmatpush1.msra.mxu0 %v269
    %744 = vmatprep.subr.mxu0 0.0
    %745 = vmatpush1.msra.mxu0 %v270
    %746 = vmatprep.subr.mxu0 0.0
    %747 = vmatpush1.msra.mxu0 0.0
    %748 = vmatprep.subr.mxu0 0.0
    %749 = vmatpush1.msra.mxu0 0.0
    %750 = vmatprep.subr.mxu0 0.0
    %751 = vmatpush1.msra.mxu0 0.0
    %752 = vmatprep.subr.mxu0 0.0
    %753 = vmatpush1.msra.mxu0 0.0
    %754 = vmatprep.subr.mxu0 0.0
    %755 = vmatpush1.msra.mxu0 0.0
    %756 = vmatprep.subr.mxu0 0.0
    %757 = vmatpush1.msra.mxu0 0.0
    %758 = vmatprep.subr.mxu0 0.0
    %759 = vmatpush1.msra.mxu0 0.0
    %760 = vmatprep.subr.mxu0 0.0
    %761 = vmatpush1.msra.mxu0 0.0
    %762 = vmatprep.subr.mxu0 0.0
    %763 = vmatpush1.msra.mxu0 0.0
    %764 = vmatprep.subr.mxu0 0.0
    %765 = vmatpush1.msra.mxu0 0.0
    %766 = vmatprep.subr.mxu0 0.0
    %767 = vmatpush1.msra.mxu0 0.0
    %768 = vmatprep.subr.mxu0 0.0
    %769 = vmatpush1.msra.mxu0 0.0
    %770 = vmatprep.subr.mxu0 0.0
    %771 = vmatpush1.msra.mxu0 0.0
    %772 = vmatprep.subr.mxu0 0.0
    %773 = vmatpush1.msra.mxu0 0.0
    %774 = vmatprep.subr.mxu0 0.0
    %775 = vmatpush1.msra.mxu0 0.0
    %776 = vmatprep.subr.mxu0 0.0
    %777 = vmatpush1.msra.mxu0 0.0
    %778 = vmatprep.subr.mxu0 0.0
    %779 = vmatpush1.msra.mxu0 0.0
    %780 = vmatprep.subr.mxu0 0.0
    %781 = vmatpush1.msra.mxu0 0.0
    %782 = vmatprep.subr.mxu0 0.0
    %783 = vmatpush1.msra.mxu0 0.0
    %784 = vmatprep.subr.mxu0 0.0
    %785 = vmatpush1.msra.mxu0 0.0
    %786 = vmatprep.subr.mxu0 0.0
    %787 = vmatpush1.msra.mxu0 0.0
    %788 = vmatprep.subr.mxu0 0.0
    %789 = vmatpush1.msra.mxu0 0.0
    %790 = vmatprep.subr.mxu0 0.0
    %791 = vmatpush1.msra.mxu0 0.0
    %792 = vmatprep.subr.mxu0 0.0
    %793 = vmatpush1.msra.mxu0 0.0
    %794 = vmatprep.subr.mxu0 0.0
    %795 = vmatpush1.msra.mxu0 0.0
    %796 = vmatprep.subr.mxu0 0.0
    %797 = vmatpush1.msra.mxu0 0.0
    %798 = vmatprep.subr.mxu0 0.0
    %799 = vmatpush1.msra.mxu0 0.0
    %800 = vmatprep.subr.mxu0 0.0
    %801 = vmatpush1.msra.mxu0 0.0
    %802 = vmatprep.mubr.f32.mxu0 0.0
    %803 = vmatmul.mubr.f32.gmra.mrb[0].mxu0 %v736
    %v804 = vpop.f32.mrb[0].mxu0
    %v805 = vadd.f32 0.0, %v804
    %v806 = vpop.f32.mrb[0].mxu0
    %807 = vdwg.mxu0
    %v808 = vadd.f32 %v734, %v805
    %v809 = vtanh.pop %v808
    %810 = vst.msk [vmem:[#allocation2 + $0xc] sm:$0x3] %vm347, %v809
    %v811 = vld [vmem:[#allocation3 + $0xe] sm:$0x3]
    %v813 = vsel %vm33, %v809, 0
    %815 = vmatprep.subr.mxu0 0.0
    %816 = vmatpush1.msra.mxu0 %v267
    %817 = vmatprep.subr.mxu0 0.0
    %818 = vmatpush1.msra.mxu0 %v268
    %819 = vmatprep.subr.mxu0 0.0
    %820 = vmatpush1.msra.mxu0 %v269
    %821 = vmatprep.subr.mxu0 0.0
    %822 = vmatpush1.msra.mxu0 %v270
    %823 = vmatprep.subr.mxu0 0.0
    %824 = vmatpush1.msra.mxu0 0.0
    %825 = vmatprep.subr.mxu0 0.0
    %826 = vmatpush1.msra.mxu0 0.0
    %827 = vmatprep.subr.mxu0 0.0
    %828 = vmatpush1.msra.mxu0 0.0
    %829 = vmatprep.subr.mxu0 0.0
    %830 = vmatpush1.msra.mxu0 0.0
    %831 = vmatprep.subr.mxu0 0.0
    %832 = vmatpush1.msra.mxu0 0.0
    %833 = vmatprep.subr.mxu0 0.0
    %834 = vmatpush1.msra.mxu0 0.0
    %835 = vmatprep.subr.mxu0 0.0
    %836 = vmatpush1.msra.mxu0 0.0
    %837 = vmatprep.subr.mxu0 0.0
    %838 = vmatpush1.msra.mxu0 0.0
    %839 = vmatprep.subr.mxu0 0.0
    %840 = vmatpush1.msra.mxu0 0.0
    %841 = vmatprep.subr.mxu0 0.0
    %842 = vmatpush1.msra.mxu0 0.0
    %843 = vmatprep.subr.mxu0 0.0
    %844 = vmatpush1.msra.mxu0 0.0
    %845 = vmatprep.subr.mxu0 0.0
    %846 = vmatpush1.msra.mxu0 0.0
    %847 = vmatprep.subr.mxu0 0.0
    %848 = vmatpush1.msra.mxu0 0.0
    %849 = vmatprep.subr.mxu0 0.0
    %850 = vmatpush1.msra.mxu0 0.0
    %851 = vmatprep.subr.mxu0 0.0
    %852 = vmatpush1.msra.mxu0 0.0
    %853 = vmatprep.subr.mxu0 0.0
    %854 = vmatpush1.msra.mxu0 0.0
    %855 = vmatprep.subr.mxu0 0.0
    %856 = vmatpush1.msra.mxu0 0.0
    %857 = vmatprep.subr.mxu0 0.0
    %858 = vmatpush1.msra.mxu0 0.0
    %859 = vmatprep.subr.mxu0 0.0
    %860 = vmatpush1.msra.mxu0 0.0
    %861 = vmatprep.subr.mxu0 0.0
    %862 = vmatpush1.msra.mxu0 0.0
    %863 = vmatprep.subr.mxu0 0.0
    %864 = vmatpush1.msra.mxu0 0.0
    %865 = vmatprep.subr.mxu0 0.0
    %866 = vmatpush1.msra.mxu0 0.0
    %867 = vmatprep.subr.mxu0 0.0
    %868 = vmatpush1.msra.mxu0 0.0
    %869 = vmatprep.subr.mxu0 0.0
    %870 = vmatpush1.msra.mxu0 0.0
    %871 = vmatprep.subr.mxu0 0.0
    %872 = vmatpush1.msra.mxu0 0.0
    %873 = vmatprep.subr.mxu0 0.0
    %874 = vmatpush1.msra.mxu0 0.0
    %875 = vmatprep.subr.mxu0 0.0
    %876 = vmatpush1.msra.mxu0 0.0
    %877 = vmatprep.subr.mxu0 0.0
    %878 = vmatpush1.msra.mxu0 0.0
    %879 = vmatprep.mubr.f32.mxu0 0.0
    %880 = vmatmul.mubr.f32.gmra.mrb[0].mxu0 %v813
    %v881 = vpop.f32.mrb[0].mxu0
    %v882 = vadd.f32 0.0, %v881
    %v883 = vpop.f32.mrb[0].mxu0
    %884 = vdwg.mxu0
    %v885 = vadd.f32 %v811, %v882
    %v886 = vtanh.pop %v885
    %887 = vst.msk [vmem:[#allocation2 + $0xe] sm:$0x3] %vm347, %v886
    %v888 = vld [vmem:[#allocation2] sm:$0xff]
    %v889 = vld [vmem:[#allocation2 + $0x8] sm:$0xff]
    %v890 = vld [vmem:[%s4] sm:$0xff]
    %v891 = vld [vmem:[%s4 + $0x8] sm:$0xff]
    %v892 = vld [vmem:[%s4 + $0x10] sm:$0xff]
    %v893 = vld [vmem:[%s4 + $0x18] sm:$0xff]
    %v894 = vld [vmem:[%s6] sm:$0x1]
    %v896 = vlaneseq
    %v897 = vshrl.u32 %v896, 7
    %v898 = vsub.s32 0, %v897
    %v899 = vrot.slane %v894, %v898
    %v902 = vsel %vm33, %v888, 0
    %v905 = vsel %vm33, %v889, 0
    %907 = vmatprep.subr.mxu0 0.0
    %908 = vmatpush1.msra.mxu0 %v890
    %909 = vmatprep.subr.mxu0 0.0
    %910 = vmatpush1.msra.mxu0 %v891
    %911 = vmatprep.subr.mxu0 0.0
    %912 = vmatpush1.msra.mxu0 %v892
    %913 = vmatprep.subr.mxu0 0.0
    %914 = vmatpush1.msra.mxu0 %v893
    %915 = vmatprep.subr.mxu0 0.0
    %916 = vmatpush1.msra.mxu0 0.0
    %917 = vmatprep.subr.mxu0 0.0
    %918 = vmatpush1.msra.mxu0 0.0
    %919 = vmatprep.subr.mxu0 0.0
    %920 = vmatpush1.msra.mxu0 0.0
    %921 = vmatprep.subr.mxu0 0.0
    %922 = vmatpush1.msra.mxu0 0.0
    %923 = vmatprep.subr.mxu0 0.0
    %924 = vmatpush1.msra.mxu0 0.0
    %925 = vmatprep.subr.mxu0 0.0
    %926 = vmatpush1.msra.mxu0 0.0
    %927 = vmatprep.subr.mxu0 0.0
    %928 = vmatpush1.msra.mxu0 0.0
    %929 = vmatprep.subr.mxu0 0.0
    %930 = vmatpush1.msra.mxu0 0.0
    %931 = vmatprep.subr.mxu0 0.0
    %932 = vmatpush1.msra.mxu0 0.0
    %933 = vmatprep.subr.mxu0 0.0
    %934 = vmatpush1.msra.mxu0 0.0
    %935 = vmatprep.subr.mxu0 0.0
    %936 = vmatpush1.msra.mxu0 0.0
    %937 = vmatprep.subr.mxu0 0.0
    %938 = vmatpush1.msra.mxu0 0.0
    %939 = vmatprep.subr.mxu0 0.0
    %940 = vmatpush1.msra.mxu0 0.0
    %941 = vmatprep.subr.mxu0 0.0
    %942 = vmatpush1.msra.mxu0 0.0
    %943 = vmatprep.subr.mxu0 0.0
    %944 = vmatpush1.msra.mxu0 0.0
    %945 = vmatprep.subr.mxu0 0.0
    %946 = vmatpush1.msra.mxu0 0.0
    %947 = vmatprep.subr.mxu0 0.0
    %948 = vmatpush1.msra.mxu0 0.0
    %949 = vmatprep.subr.mxu0 0.0
    %950 = vmatpush1.msra.mxu0 0.0
    %951 = vmatprep.subr.mxu0 0.0
    %952 = vmatpush1.msra.mxu0 0.0
    %953 = vmatprep.subr.mxu0 0.0
    %954 = vmatpush1.msra.mxu0 0.0
    %955 = vmatprep.subr.mxu0 0.0
    %956 = vmatpush1.msra.mxu0 0.0
    %957 = vmatprep.subr.mxu0 0.0
    %958 = vmatpush1.msra.mxu0 0.0
    %959 = vmatprep.subr.mxu0 0.0
    %960 = vmatpush1.msra.mxu0 0.0
    %961 = vmatprep.subr.mxu0 0.0
    %962 = vmatpush1.msra.mxu0 0.0
    %963 = vmatprep.subr.mxu0 0.0
    %964 = vmatpush1.msra.mxu0 0.0
    %965 = vmatprep.subr.mxu0 0.0
    %966 = vmatpush1.msra.mxu0 0.0
    %967 = vmatprep.subr.mxu0 0.0
    %968 = vmatpush1.msra.mxu0 0.0
    %969 = vmatprep.subr.mxu0 0.0
    %970 = vmatpush1.msra.mxu0 0.0
    %971 = vmatprep.mubr.f32.mxu0 0.0
    %972 = vmatmul.mubr.f32.gmra.mrb[0].mxu0 %v902
    %v973 = vpop.f32.mrb[0].mxu0
    %v974 = vadd.f32 %v899, %v973
    %v975 = vpop.f32.mrb[0].mxu0
    %976 = vmatprep.mubr.f32.mxu0 0.0
    %977 = vmatmul.mubr.f32.gmra.mrb[0].mxu0 %v905
    %v978 = vpop.f32.mrb[0].mxu0
    %v979 = vadd.f32 %v899, %v978
    %v980 = vpop.f32.mrb[0].mxu0
    %981 = vdwg.mxu0
    %982 = vst.msk [vmem:[#allocation3] sm:$0xff] %vm33, %v974
    %983 = vst.msk [vmem:[#allocation3 + $0x8] sm:$0xff] %vm33, %v979
    %v984 = vld [vmem:[%s5] sm:$0xff]
    %v985 = vld [vmem:[%s5 + $0x8] sm:$0xff]
    %v986 = vld [vmem:[%s5 + $0x10] sm:$0xff]
    %v987 = vld [vmem:[%s5 + $0x18] sm:$0xff]
    %v988 = vld [vmem:[#allocation3] sm:$0x3]
    %989 = vmatprep.subr.mxu0 0.0
    %990 = vmatpush1.msra.mxu0 %v984
    %991 = vmatprep.subr.mxu0 0.0
    %992 = vmatpush1.msra.mxu0 %v985
    %993 = vmatprep.subr.mxu0 0.0
    %994 = vmatpush1.msra.mxu0 %v986
    %995 = vmatprep.subr.mxu0 0.0
    %996 = vmatpush1.msra.mxu0 %v987
    %997 = vmatprep.subr.mxu0 0.0
    %998 = vmatpush1.msra.mxu0 0.0
    %999 = vmatprep.subr.mxu0 0.0
    %1000 = vmatpush1.msra.mxu0 0.0
    %1001 = vmatprep.subr.mxu0 0.0
    %1002 = vmatpush1.msra.mxu0 0.0
    %1003 = vmatprep.subr.mxu0 0.0
    %1004 = vmatpush1.msra.mxu0 0.0
    %1005 = vmatprep.subr.mxu0 0.0
    %1006 = vmatpush1.msra.mxu0 0.0
    %1007 = vmatprep.subr.mxu0 0.0
    %1008 = vmatpush1.msra.mxu0 0.0
    %1009 = vmatprep.subr.mxu0 0.0
    %1010 = vmatpush1.msra.mxu0 0.0
    %1011 = vmatprep.subr.mxu0 0.0
    %1012 = vmatpush1.msra.mxu0 0.0
    %1013 = vmatprep.subr.mxu0 0.0
    %1014 = vmatpush1.msra.mxu0 0.0
    %1015 = vmatprep.subr.mxu0 0.0
    %1016 = vmatpush1.msra.mxu0 0.0
    %1017 = vmatprep.subr.mxu0 0.0
    %1018 = vmatpush1.msra.mxu0 0.0
    %1019 = vmatprep.subr.mxu0 0.0
    %1020 = vmatpush1.msra.mxu0 0.0
    %1021 = vmatprep.subr.mxu0 0.0
    %1022 = vmatpush1.msra.mxu0 0.0
    %1023 = vmatprep.subr.mxu0 0.0
    %1024 = vmatpush1.msra.mxu0 0.0
    %1025 = vmatprep.subr.mxu0 0.0
    %1026 = vmatpush1.msra.mxu0 0.0
    %1027 = vmatprep.subr.mxu0 0.0
    %1028 = vmatpush1.msra.mxu0 0.0
    %1029 = vmatprep.subr.mxu0 0.0
    %1030 = vmatpush1.msra.mxu0 0.0
    %1031 = vmatprep.subr.mxu0 0.0
    %1032 = vmatpush1.msra.mxu0 0.0
    %1033 = vmatprep.subr.mxu0 0.0
    %1034 = vmatpush1.msra.mxu0 0.0
    %1035 = vmatprep.subr.mxu0 0.0
    %1036 = vmatpush1.msra.mxu0 0.0
    %1037 = vmatprep.subr.mxu0 0.0
    %1038 = vmatpush1.msra.mxu0 0.0
    %1039 = vmatprep.subr.mxu0 0.0
    %1040 = vmatpush1.msra.mxu0 0.0
    %1041 = vmatprep.subr.mxu0 0.0
    %1042 = vmatpush1.msra.mxu0 0.0
    %1043 = vmatprep.subr.mxu0 0.0
    %1044 = vmatpush1.msra.mxu0 0.0
    %1045 = vmatprep.subr.mxu0 0.0
    %1046 = vmatpush1.msra.mxu0 0.0
    %1047 = vmatprep.subr.mxu0 0.0
    %1048 = vmatpush1.msra.mxu0 0.0
    %1049 = vmatprep.subr.mxu0 0.0
    %1050 = vmatpush1.msra.mxu0 0.0
    %1051 = vmatprep.subr.mxu0 0.0
    %1052 = vmatpush1.msra.mxu0 0.0
    %1053 = vmatprep.mubr.f32.mxu0 0.0
    %1054 = vmatmul.mubr.f32.gmra.mrb[0].mxu0 %v273
    %v1055 = vpop.f32.mrb[0].mxu0
    %v1056 = vadd.f32 0.0, %v1055
    %v1057 = vpop.f32.mrb[0].mxu0
    %1058 = vdwg.mxu0
    %v1059 = vadd.f32 %v988, %v1056
    %v1060 = vtanh.pop %v1059
    %1061 = vst.msk [vmem:[#allocation2] sm:$0x3] %vm347, %v1060
    %v1062 = vld [vmem:[#allocation3 + $0x2] sm:$0x3]
    %v1064 = vsel %vm33, %v1060, 0
    %1066 = vmatprep.subr.mxu0 0.0
    %1067 = vmatpush1.msra.mxu0 %v984
    %1068 = vmatprep.subr.mxu0 0.0
    %1069 = vmatpush1.msra.mxu0 %v985
    %1070 = vmatprep.subr.mxu0 0.0
    %1071 = vmatpush1.msra.mxu0 %v986
    %1072 = vmatprep.subr.mxu0 0.0
    %1073 = vmatpush1.msra.mxu0 %v987
    %1074 = vmatprep.subr.mxu0 0.0
    %1075 = vmatpush1.msra.mxu0 0.0
    %1076 = vmatprep.subr.mxu0 0.0
    %1077 = vmatpush1.msra.mxu0 0.0
    %1078 = vmatprep.subr.mxu0 0.0
    %1079 = vmatpush1.msra.mxu0 0.0
    %1080 = vmatprep.subr.mxu0 0.0
    %1081 = vmatpush1.msra.mxu0 0.0
    %1082 = vmatprep.subr.mxu0 0.0
    %1083 = vmatpush1.msra.mxu0 0.0
    %1084 = vmatprep.subr.mxu0 0.0
    %1085 = vmatpush1.msra.mxu0 0.0
    %1086 = vmatprep.subr.mxu0 0.0
    %1087 = vmatpush1.msra.mxu0 0.0
    %1088 = vmatprep.subr.mxu0 0.0
    %1089 = vmatpush1.msra.mxu0 0.0
    %1090 = vmatprep.subr.mxu0 0.0
    %1091 = vmatpush1.msra.mxu0 0.0
    %1092 = vmatprep.subr.mxu0 0.0
    %1093 = vmatpush1.msra.mxu0 0.0
    %1094 = vmatprep.subr.mxu0 0.0
    %1095 = vmatpush1.msra.mxu0 0.0
    %1096 = vmatprep.subr.mxu0 0.0
    %1097 = vmatpush1.msra.mxu0 0.0
    %1098 = vmatprep.subr.mxu0 0.0
    %1099 = vmatpush1.msra.mxu0 0.0
    %1100 = vmatprep.subr.mxu0 0.0
    %1101 = vmatpush1.msra.mxu0 0.0
    %1102 = vmatprep.subr.mxu0 0.0
    %1103 = vmatpush1.msra.mxu0 0.0
    %1104 = vmatprep.subr.mxu0 0.0
    %1105 = vmatpush1.msra.mxu0 0.0
    %1106 = vmatprep.subr.mxu0 0.0
    %1107 = vmatpush1.msra.mxu0 0.0
    %1108 = vmatprep.subr.mxu0 0.0
    %1109 = vmatpush1.msra.mxu0 0.0
    %1110 = vmatprep.subr.mxu0 0.0
    %1111 = vmatpush1.msra.mxu0 0.0
    %1112 = vmatprep.subr.mxu0 0.0
    %1113 = vmatpush1.msra.mxu0 0.0
    %1114 = vmatprep.subr.mxu0 0.0
    %1115 = vmatpush1.msra.mxu0 0.0
    %1116 = vmatprep.subr.mxu0 0.0
    %1117 = vmatpush1.msra.mxu0 0.0
    %1118 = vmatprep.subr.mxu0 0.0
    %1119 = vmatpush1.msra.mxu0 0.0
    %1120 = vmatprep.subr.mxu0 0.0
    %1121 = vmatpush1.msra.mxu0 0.0
    %1122 = vmatprep.subr.mxu0 0.0
    %1123 = vmatpush1.msra.mxu0 0.0
    %1124 = vmatprep.subr.mxu0 0.0
    %1125 = vmatpush1.msra.mxu0 0.0
    %1126 = vmatprep.subr.mxu0 0.0
    %1127 = vmatpush1.msra.mxu0 0.0
    %1128 = vmatprep.subr.mxu0 0.0
    %1129 = vmatpush1.msra.mxu0 0.0
    %1130 = vmatprep.mubr.f32.mxu0 0.0
    %1131 = vmatmul.mubr.f32.gmra.mrb[0].mxu0 %v1064
    %v1132 = vpop.f32.mrb[0].mxu0
    %v1133 = vadd.f32 0.0, %v1132
    %v1134 = vpop.f32.mrb[0].mxu0
    %1135 = vdwg.mxu0
    %v1136 = vadd.f32 %v1062, %v1133
    %v1137 = vtanh.pop %v1136
    %1138 = vst.msk [vmem:[#allocation2 + $0x2] sm:$0x3] %vm347, %v1137
    %v1139 = vld [vmem:[#allocation3 + $0x4] sm:$0x3]
    %v1141 = vsel %vm33, %v1137, 0
    %1143 = vmatprep.subr.mxu0 0.0
    %1144 = vmatpush1.msra.mxu0 %v984
    %1145 = vmatprep.subr.mxu0 0.0
    %1146 = vmatpush1.msra.mxu0 %v985
    %1147 = vmatprep.subr.mxu0 0.0
    %1148 = vmatpush1.msra.mxu0 %v986
    %1149 = vmatprep.subr.mxu0 0.0
    %1150 = vmatpush1.msra.mxu0 %v987
    %1151 = vmatprep.subr.mxu0 0.0
    %1152 = vmatpush1.msra.mxu0 0.0
    %1153 = vmatprep.subr.mxu0 0.0
    %1154 = vmatpush1.msra.mxu0 0.0
    %1155 = vmatprep.subr.mxu0 0.0
    %1156 = vmatpush1.msra.mxu0 0.0
    %1157 = vmatprep.subr.mxu0 0.0
    %1158 = vmatpush1.msra.mxu0 0.0
    %1159 = vmatprep.subr.mxu0 0.0
    %1160 = vmatpush1.msra.mxu0 0.0
    %1161 = vmatprep.subr.mxu0 0.0
    %1162 = vmatpush1.msra.mxu0 0.0
    %1163 = vmatprep.subr.mxu0 0.0
    %1164 = vmatpush1.msra.mxu0 0.0
    %1165 = vmatprep.subr.mxu0 0.0
    %1166 = vmatpush1.msra.mxu0 0.0
    %1167 = vmatprep.subr.mxu0 0.0
    %1168 = vmatpush1.msra.mxu0 0.0
    %1169 = vmatprep.subr.mxu0 0.0
    %1170 = vmatpush1.msra.mxu0 0.0
    %1171 = vmatprep.subr.mxu0 0.0
    %1172 = vmatpush1.msra.mxu0 0.0
    %1173 = vmatprep.subr.mxu0 0.0
    %1174 = vmatpush1.msra.mxu0 0.0
    %1175 = vmatprep.subr.mxu0 0.0
    %1176 = vmatpush1.msra.mxu0 0.0
    %1177 = vmatprep.subr.mxu0 0.0
    %1178 = vmatpush1.msra.mxu0 0.0
    %1179 = vmatprep.subr.mxu0 0.0
    %1180 = vmatpush1.msra.mxu0 0.0
    %1181 = vmatprep.subr.mxu0 0.0
    %1182 = vmatpush1.msra.mxu0 0.0
    %1183 = vmatprep.subr.mxu0 0.0
    %1184 = vmatpush1.msra.mxu0 0.0
    %1185 = vmatprep.subr.mxu0 0.0
    %1186 = vmatpush1.msra.mxu0 0.0
    %1187 = vmatprep.subr.mxu0 0.0
    %1188 = vmatpush1.msra.mxu0 0.0
    %1189 = vmatprep.subr.mxu0 0.0
    %1190 = vmatpush1.msra.mxu0 0.0
    %1191 = vmatprep.subr.mxu0 0.0
    %1192 = vmatpush1.msra.mxu0 0.0
    %1193 = vmatprep.subr.mxu0 0.0
    %1194 = vmatpush1.msra.mxu0 0.0
    %1195 = vmatprep.subr.mxu0 0.0
    %1196 = vmatpush1.msra.mxu0 0.0
    %1197 = vmatprep.subr.mxu0 0.0
    %1198 = vmatpush1.msra.mxu0 0.0
    %1199 = vmatprep.subr.mxu0 0.0
    %1200 = vmatpush1.msra.mxu0 0.0
    %1201 = vmatprep.subr.mxu0 0.0
    %1202 = vmatpush1.msra.mxu0 0.0
    %1203 = vmatprep.subr.mxu0 0.0
    %1204 = vmatpush1.msra.mxu0 0.0
    %1205 = vmatprep.subr.mxu0 0.0
    %1206 = vmatpush1.msra.mxu0 0.0
    %1207 = vmatprep.mubr.f32.mxu0 0.0
    %1208 = vmatmul.mubr.f32.gmra.mrb[0].mxu0 %v1141
    %v1209 = vpop.f32.mrb[0].mxu0
    %v1210 = vadd.f32 0.0, %v1209
    %v1211 = vpop.f32.mrb[0].mxu0
    %1212 = vdwg.mxu0
    %v1213 = vadd.f32 %v1139, %v1210
    %v1214 = vtanh.pop %v1213
    %1215 = vst.msk [vmem:[#allocation2 + $0x4] sm:$0x3] %vm347, %v1214
    %v1216 = vld [vmem:[#allocation3 + $0x6] sm:$0x3]
    %v1218 = vsel %vm33, %v1214, 0
    %1220 = vmatprep.subr.mxu0 0.0
    %1221 = vmatpush1.msra.mxu0 %v984
    %1222 = vmatprep.subr.mxu0 0.0
    %1223 = vmatpush1.msra.mxu0 %v985
    %1224 = vmatprep.subr.mxu0 0.0
    %1225 = vmatpush1.msra.mxu0 %v986
    %1226 = vmatprep.subr.mxu0 0.0
    %1227 = vmatpush1.msra.mxu0 %v987
    %1228 = vmatprep.subr.mxu0 0.0
    %1229 = vmatpush1.msra.mxu0 0.0
    %1230 = vmatprep.subr.mxu0 0.0
    %1231 = vmatpush1.msra.mxu0 0.0
    %1232 = vmatprep.subr.mxu0 0.0
    %1233 = vmatpush1.msra.mxu0 0.0
    %1234 = vmatprep.subr.mxu0 0.0
    %1235 = vmatpush1.msra.mxu0 0.0
    %1236 = vmatprep.subr.mxu0 0.0
    %1237 = vmatpush1.msra.mxu0 0.0
    %1238 = vmatprep.subr.mxu0 0.0
    %1239 = vmatpush1.msra.mxu0 0.0
    %1240 = vmatprep.subr.mxu0 0.0
    %1241 = vmatpush1.msra.mxu0 0.0
    %1242 = vmatprep.subr.mxu0 0.0
    %1243 = vmatpush1.msra.mxu0 0.0
    %1244 = vmatprep.subr.mxu0 0.0
    %1245 = vmatpush1.msra.mxu0 0.0
    %1246 = vmatprep.subr.mxu0 0.0
    %1247 = vmatpush1.msra.mxu0 0.0
    %1248 = vmatprep.subr.mxu0 0.0
    %1249 = vmatpush1.msra.mxu0 0.0
    %1250 = vmatprep.subr.mxu0 0.0
    %1251 = vmatpush1.msra.mxu0 0.0
    %1252 = vmatprep.subr.mxu0 0.0
    %1253 = vmatpush1.msra.mxu0 0.0
    %1254 = vmatprep.subr.mxu0 0.0
    %1255 = vmatpush1.msra.mxu0 0.0
    %1256 = vmatprep.subr.mxu0 0.0
    %1257 = vmatpush1.msra.mxu0 0.0
    %1258 = vmatprep.subr.mxu0 0.0
    %1259 = vmatpush1.msra.mxu0 0.0
    %1260 = vmatprep.subr.mxu0 0.0
    %1261 = vmatpush1.msra.mxu0 0.0
    %1262 = vmatprep.subr.mxu0 0.0
    %1263 = vmatpush1.msra.mxu0 0.0
    %1264 = vmatprep.subr.mxu0 0.0
    %1265 = vmatpush1.msra.mxu0 0.0
    %1266 = vmatprep.subr.mxu0 0.0
    %1267 = vmatpush1.msra.mxu0 0.0
    %1268 = vmatprep.subr.mxu0 0.0
    %1269 = vmatpush1.msra.mxu0 0.0
    %1270 = vmatprep.subr.mxu0 0.0
    %1271 = vmatpush1.msra.mxu0 0.0
    %1272 = vmatprep.subr.mxu0 0.0
    %1273 = vmatpush1.msra.mxu0 0.0
    %1274 = vmatprep.subr.mxu0 0.0
    %1275 = vmatpush1.msra.mxu0 0.0
    %1276 = vmatprep.subr.mxu0 0.0
    %1277 = vmatpush1.msra.mxu0 0.0
    %1278 = vmatprep.subr.mxu0 0.0
    %1279 = vmatpush1.msra.mxu0 0.0
    %1280 = vmatprep.subr.mxu0 0.0
    %1281 = vmatpush1.msra.mxu0 0.0
    %1282 = vmatprep.subr.mxu0 0.0
    %1283 = vmatpush1.msra.mxu0 0.0
    %1284 = vmatprep.mubr.f32.mxu0 0.0
    %1285 = vmatmul.mubr.f32.gmra.mrb[0].mxu0 %v1218
    %v1286 = vpop.f32.mrb[0].mxu0
    %v1287 = vadd.f32 0.0, %v1286
    %v1288 = vpop.f32.mrb[0].mxu0
    %1289 = vdwg.mxu0
    %v1290 = vadd.f32 %v1216, %v1287
    %v1291 = vtanh.pop %v1290
    %1292 = vst.msk [vmem:[#allocation2 + $0x6] sm:$0x3] %vm347, %v1291
    %v1293 = vld [vmem:[#allocation3 + $0x8] sm:$0x3]
    %v1295 = vsel %vm33, %v1291, 0
    %1297 = vmatprep.subr.mxu0 0.0
    %1298 = vmatpush1.msra.mxu0 %v984
    %1299 = vmatprep.subr.mxu0 0.0
    %1300 = vmatpush1.msra.mxu0 %v985
    %1301 = vmatprep.subr.mxu0 0.0
    %1302 = vmatpush1.msra.mxu0 %v986
    %1303 = vmatprep.subr.mxu0 0.0
    %1304 = vmatpush1.msra.mxu0 %v987
    %1305 = vmatprep.subr.mxu0 0.0
    %1306 = vmatpush1.msra.mxu0 0.0
    %1307 = vmatprep.subr.mxu0 0.0
    %1308 = vmatpush1.msra.mxu0 0.0
    %1309 = vmatprep.subr.mxu0 0.0
    %1310 = vmatpush1.msra.mxu0 0.0
    %1311 = vmatprep.subr.mxu0 0.0
    %1312 = vmatpush1.msra.mxu0 0.0
    %1313 = vmatprep.subr.mxu0 0.0
    %1314 = vmatpush1.msra.mxu0 0.0
    %1315 = vmatprep.subr.mxu0 0.0
    %1316 = vmatpush1.msra.mxu0 0.0
    %1317 = vmatprep.subr.mxu0 0.0
    %1318 = vmatpush1.msra.mxu0 0.0
    %1319 = vmatprep.subr.mxu0 0.0
    %1320 = vmatpush1.msra.mxu0 0.0
    %1321 = vmatprep.subr.mxu0 0.0
    %1322 = vmatpush1.msra.mxu0 0.0
    %1323 = vmatprep.subr.mxu0 0.0
    %1324 = vmatpush1.msra.mxu0 0.0
    %1325 = vmatprep.subr.mxu0 0.0
    %1326 = vmatpush1.msra.mxu0 0.0
    %1327 = vmatprep.subr.mxu0 0.0
    %1328 = vmatpush1.msra.mxu0 0.0
    %1329 = vmatprep.subr.mxu0 0.0
    %1330 = vmatpush1.msra.mxu0 0.0
    %1331 = vmatprep.subr.mxu0 0.0
    %1332 = vmatpush1.msra.mxu0 0.0
    %1333 = vmatprep.subr.mxu0 0.0
    %1334 = vmatpush1.msra.mxu0 0.0
    %1335 = vmatprep.subr.mxu0 0.0
    %1336 = vmatpush1.msra.mxu0 0.0
    %1337 = vmatprep.subr.mxu0 0.0
    %1338 = vmatpush1.msra.mxu0 0.0
    %1339 = vmatprep.subr.mxu0 0.0
    %1340 = vmatpush1.msra.mxu0 0.0
    %1341 = vmatprep.subr.mxu0 0.0
    %1342 = vmatpush1.msra.mxu0 0.0
    %1343 = vmatprep.subr.mxu0 0.0
    %1344 = vmatpush1.msra.mxu0 0.0
    %1345 = vmatprep.subr.mxu0 0.0
    %1346 = vmatpush1.msra.mxu0 0.0
    %1347 = vmatprep.subr.mxu0 0.0
    %1348 = vmatpush1.msra.mxu0 0.0
    %1349 = vmatprep.subr.mxu0 0.0
    %1350 = vmatpush1.msra.mxu0 0.0
    %1351 = vmatprep.subr.mxu0 0.0
    %1352 = vmatpush1.msra.mxu0 0.0
    %1353 = vmatprep.subr.mxu0 0.0
    %1354 = vmatpush1.msra.mxu0 0.0
    %1355 = vmatprep.subr.mxu0 0.0
    %1356 = vmatpush1.msra.mxu0 0.0
    %1357 = vmatprep.subr.mxu0 0.0
    %1358 = vmatpush1.msra.mxu0 0.0
    %1359 = vmatprep.subr.mxu0 0.0
    %1360 = vmatpush1.msra.mxu0 0.0
    %1361 = vmatprep.mubr.f32.mxu0 0.0
    %1362 = vmatmul.mubr.f32.gmra.mrb[0].mxu0 %v1295
    %v1363 = vpop.f32.mrb[0].mxu0
    %v1364 = vadd.f32 0.0, %v1363
    %v1365 = vpop.f32.mrb[0].mxu0
    %1366 = vdwg.mxu0
    %v1367 = vadd.f32 %v1293, %v1364
    %v1368 = vtanh.pop %v1367
    %1369 = vst.msk [vmem:[#allocation2 + $0x8] sm:$0x3] %vm347, %v1368
    %v1370 = vld [vmem:[#allocation3 + $0xa] sm:$0x3]
    %v1372 = vsel %vm33, %v1368, 0
    %1374 = vmatprep.subr.mxu0 0.0
    %1375 = vmatpush1.msra.mxu0 %v984
    %1376 = vmatprep.subr.mxu0 0.0
    %1377 = vmatpush1.msra.mxu0 %v985
    %1378 = vmatprep.subr.mxu0 0.0
    %1379 = vmatpush1.msra.mxu0 %v986
    %1380 = vmatprep.subr.mxu0 0.0
    %1381 = vmatpush1.msra.mxu0 %v987
    %1382 = vmatprep.subr.mxu0 0.0
    %1383 = vmatpush1.msra.mxu0 0.0
    %1384 = vmatprep.subr.mxu0 0.0
    %1385 = vmatpush1.msra.mxu0 0.0
    %1386 = vmatprep.subr.mxu0 0.0
    %1387 = vmatpush1.msra.mxu0 0.0
    %1388 = vmatprep.subr.mxu0 0.0
    %1389 = vmatpush1.msra.mxu0 0.0
    %1390 = vmatprep.subr.mxu0 0.0
    %1391 = vmatpush1.msra.mxu0 0.0
    %1392 = vmatprep.subr.mxu0 0.0
    %1393 = vmatpush1.msra.mxu0 0.0
    %1394 = vmatprep.subr.mxu0 0.0
    %1395 = vmatpush1.msra.mxu0 0.0
    %1396 = vmatprep.subr.mxu0 0.0
    %1397 = vmatpush1.msra.mxu0 0.0
    %1398 = vmatprep.subr.mxu0 0.0
    %1399 = vmatpush1.msra.mxu0 0.0
    %1400 = vmatprep.subr.mxu0 0.0
    %1401 = vmatpush1.msra.mxu0 0.0
    %1402 = vmatprep.subr.mxu0 0.0
    %1403 = vmatpush1.msra.mxu0 0.0
    %1404 = vmatprep.subr.mxu0 0.0
    %1405 = vmatpush1.msra.mxu0 0.0
    %1406 = vmatprep.subr.mxu0 0.0
    %1407 = vmatpush1.msra.mxu0 0.0
    %1408 = vmatprep.subr.mxu0 0.0
    %1409 = vmatpush1.msra.mxu0 0.0
    %1410 = vmatprep.subr.mxu0 0.0
    %1411 = vmatpush1.msra.mxu0 0.0
    %1412 = vmatprep.subr.mxu0 0.0
    %1413 = vmatpush1.msra.mxu0 0.0
    %1414 = vmatprep.subr.mxu0 0.0
    %1415 = vmatpush1.msra.mxu0 0.0
    %1416 = vmatprep.subr.mxu0 0.0
    %1417 = vmatpush1.msra.mxu0 0.0
    %1418 = vmatprep.subr.mxu0 0.0
    %1419 = vmatpush1.msra.mxu0 0.0
    %1420 = vmatprep.subr.mxu0 0.0
    %1421 = vmatpush1.msra.mxu0 0.0
    %1422 = vmatprep.subr.mxu0 0.0
    %1423 = vmatpush1.msra.mxu0 0.0
    %1424 = vmatprep.subr.mxu0 0.0
    %1425 = vmatpush1.msra.mxu0 0.0
    %1426 = vmatprep.subr.mxu0 0.0
    %1427 = vmatpush1.msra.mxu0 0.0
    %1428 = vmatprep.subr.mxu0 0.0
    %1429 = vmatpush1.msra.mxu0 0.0
    %1430 = vmatprep.subr.mxu0 0.0
    %1431 = vmatpush1.msra.mxu0 0.0
    %1432 = vmatprep.subr.mxu0 0.0
    %1433 = vmatpush1.msra.mxu0 0.0
    %1434 = vmatprep.subr.mxu0 0.0
    %1435 = vmatpush1.msra.mxu0 0.0
    %1436 = vmatprep.subr.mxu0 0.0
    %1437 = vmatpush1.msra.mxu0 0.0
    %1438 = vmatprep.mubr.f32.mxu0 0.0
    %1439 = vmatmul.mubr.f32.gmra.mrb[0].mxu0 %v1372
    %v1440 = vpop.f32.mrb[0].mxu0
    %v1441 = vadd.f32 0.0, %v1440
    %v1442 = vpop.f32.mrb[0].mxu0
    %1443 = vdwg.mxu0
    %v1444 = vadd.f32 %v1370, %v1441
    %v1445 = vtanh.pop %v1444
    %1446 = vst.msk [vmem:[#allocation2 + $0xa] sm:$0x3] %vm347, %v1445
    %v1447 = vld [vmem:[#allocation3 + $0xc] sm:$0x3]
    %v1449 = vsel %vm33, %v1445, 0
    %1451 = vmatprep.subr.mxu0 0.0
    %1452 = vmatpush1.msra.mxu0 %v984
    %1453 = vmatprep.subr.mxu0 0.0
    %1454 = vmatpush1.msra.mxu0 %v985
    %1455 = vmatprep.subr.mxu0 0.0
    %1456 = vmatpush1.msra.mxu0 %v986
    %1457 = vmatprep.subr.mxu0 0.0
    %1458 = vmatpush1.msra.mxu0 %v987
    %1459 = vmatprep.subr.mxu0 0.0
    %1460 = vmatpush1.msra.mxu0 0.0
    %1461 = vmatprep.subr.mxu0 0.0
    %1462 = vmatpush1.msra.mxu0 0.0
    %1463 = vmatprep.subr.mxu0 0.0
    %1464 = vmatpush1.msra.mxu0 0.0
    %1465 = vmatprep.subr.mxu0 0.0
    %1466 = vmatpush1.msra.mxu0 0.0
    %1467 = vmatprep.subr.mxu0 0.0
    %1468 = vmatpush1.msra.mxu0 0.0
    %1469 = vmatprep.subr.mxu0 0.0
    %1470 = vmatpush1.msra.mxu0 0.0
    %1471 = vmatprep.subr.mxu0 0.0
    %1472 = vmatpush1.msra.mxu0 0.0
    %1473 = vmatprep.subr.mxu0 0.0
    %1474 = vmatpush1.msra.mxu0 0.0
    %1475 = vmatprep.subr.mxu0 0.0
    %1476 = vmatpush1.msra.mxu0 0.0
    %1477 = vmatprep.subr.mxu0 0.0
    %1478 = vmatpush1.msra.mxu0 0.0
    %1479 = vmatprep.subr.mxu0 0.0
    %1480 = vmatpush1.msra.mxu0 0.0
    %1481 = vmatprep.subr.mxu0 0.0
    %1482 = vmatpush1.msra.mxu0 0.0
    %1483 = vmatprep.subr.mxu0 0.0
    %1484 = vmatpush1.msra.mxu0 0.0
    %1485 = vmatprep.subr.mxu0 0.0
    %1486 = vmatpush1.msra.mxu0 0.0
    %1487 = vmatprep.subr.mxu0 0.0
    %1488 = vmatpush1.msra.mxu0 0.0
    %1489 = vmatprep.subr.mxu0 0.0
    %1490 = vmatpush1.msra.mxu0 0.0
    %1491 = vmatprep.subr.mxu0 0.0
    %1492 = vmatpush1.msra.mxu0 0.0
    %1493 = vmatprep.subr.mxu0 0.0
    %1494 = vmatpush1.msra.mxu0 0.0
    %1495 = vmatprep.subr.mxu0 0.0
    %1496 = vmatpush1.msra.mxu0 0.0
    %1497 = vmatprep.subr.mxu0 0.0
    %1498 = vmatpush1.msra.mxu0 0.0
    %1499 = vmatprep.subr.mxu0 0.0
    %1500 = vmatpush1.msra.mxu0 0.0
    %1501 = vmatprep.subr.mxu0 0.0
    %1502 = vmatpush1.msra.mxu0 0.0
    %1503 = vmatprep.subr.mxu0 0.0
    %1504 = vmatpush1.msra.mxu0 0.0
    %1505 = vmatprep.subr.mxu0 0.0
    %1506 = vmatpush1.msra.mxu0 0.0
    %1507 = vmatprep.subr.mxu0 0.0
    %1508 = vmatpush1.msra.mxu0 0.0
    %1509 = vmatprep.subr.mxu0 0.0
    %1510 = vmatpush1.msra.mxu0 0.0
    %1511 = vmatprep.subr.mxu0 0.0
    %1512 = vmatpush1.msra.mxu0 0.0
    %1513 = vmatprep.subr.mxu0 0.0
    %1514 = vmatpush1.msra.mxu0 0.0
    %1515 = vmatprep.mubr.f32.mxu0 0.0
    %1516 = vmatmul.mubr.f32.gmra.mrb[0].mxu0 %v1449
    %v1517 = vpop.f32.mrb[0].mxu0
    %v1518 = vadd.f32 0.0, %v1517
    %v1519 = vpop.f32.mrb[0].mxu0
    %1520 = vdwg.mxu0
    %v1521 = vadd.f32 %v1447, %v1518
    %v1522 = vtanh.pop %v1521
    %1523 = vst.msk [vmem:[#allocation2 + $0xc] sm:$0x3] %vm347, %v1522
    %v1524 = vld [vmem:[#allocation3 + $0xe] sm:$0x3]
    %v1526 = vsel %vm33, %v1522, 0
    %1528 = vmatprep.subr.mxu0 0.0
    %1529 = vmatpush1.msra.mxu0 %v984
    %1530 = vmatprep.subr.mxu0 0.0
    %1531 = vmatpush1.msra.mxu0 %v985
    %1532 = vmatprep.subr.mxu0 0.0
    %1533 = vmatpush1.msra.mxu0 %v986
    %1534 = vmatprep.subr.mxu0 0.0
    %1535 = vmatpush1.msra.mxu0 %v987
    %1536 = vmatprep.subr.mxu0 0.0
    %1537 = vmatpush1.msra.mxu0 0.0
    %1538 = vmatprep.subr.mxu0 0.0
    %1539 = vmatpush1.msra.mxu0 0.0
    %1540 = vmatprep.subr.mxu0 0.0
    %1541 = vmatpush1.msra.mxu0 0.0
    %1542 = vmatprep.subr.mxu0 0.0
    %1543 = vmatpush1.msra.mxu0 0.0
    %1544 = vmatprep.subr.mxu0 0.0
    %1545 = vmatpush1.msra.mxu0 0.0
    %1546 = vmatprep.subr.mxu0 0.0
    %1547 = vmatpush1.msra.mxu0 0.0
    %1548 = vmatprep.subr.mxu0 0.0
    %1549 = vmatpush1.msra.mxu0 0.0
    %1550 = vmatprep.subr.mxu0 0.0
    %1551 = vmatpush1.msra.mxu0 0.0
    %1552 = vmatprep.subr.mxu0 0.0
    %1553 = vmatpush1.msra.mxu0 0.0
    %1554 = vmatprep.subr.mxu0 0.0
    %1555 = vmatpush1.msra.mxu0 0.0
    %1556 = vmatprep.subr.mxu0 0.0
    %1557 = vmatpush1.msra.mxu0 0.0
    %1558 = vmatprep.subr.mxu0 0.0
    %1559 = vmatpush1.msra.mxu0 0.0
    %1560 = vmatprep.subr.mxu0 0.0
    %1561 = vmatpush1.msra.mxu0 0.0
    %1562 = vmatprep.subr.mxu0 0.0
    %1563 = vmatpush1.msra.mxu0 0.0
    %1564 = vmatprep.subr.mxu0 0.0
    %1565 = vmatpush1.msra.mxu0 0.0
    %1566 = vmatprep.subr.mxu0 0.0
    %1567 = vmatpush1.msra.mxu0 0.0
    %1568 = vmatprep.subr.mxu0 0.0
    %1569 = vmatpush1.msra.mxu0 0.0
    %1570 = vmatprep.subr.mxu0 0.0
    %1571 = vmatpush1.msra.mxu0 0.0
    %1572 = vmatprep.subr.mxu0 0.0
    %1573 = vmatpush1.msra.mxu0 0.0
    %1574 = vmatprep.subr.mxu0 0.0
    %1575 = vmatpush1.msra.mxu0 0.0
    %1576 = vmatprep.subr.mxu0 0.0
    %1577 = vmatpush1.msra.mxu0 0.0
    %1578 = vmatprep.subr.mxu0 0.0
    %1579 = vmatpush1.msra.mxu0 0.0
    %1580 = vmatprep.subr.mxu0 0.0
    %1581 = vmatpush1.msra.mxu0 0.0
    %1582 = vmatprep.subr.mxu0 0.0
    %1583 = vmatpush1.msra.mxu0 0.0
    %1584 = vmatprep.subr.mxu0 0.0
    %1585 = vmatpush1.msra.mxu0 0.0
    %1586 = vmatprep.subr.mxu0 0.0
    %1587 = vmatpush1.msra.mxu0 0.0
    %1588 = vmatprep.subr.mxu0 0.0
    %1589 = vmatpush1.msra.mxu0 0.0
    %1590 = vmatprep.subr.mxu0 0.0
    %1591 = vmatpush1.msra.mxu0 0.0
    %1592 = vmatprep.mubr.f32.mxu0 0.0
    %1593 = vmatmul.mubr.f32.gmra.mrb[0].mxu0 %v1526
    %v1594 = vpop.f32.mrb[0].mxu0
    %v1595 = vadd.f32 0.0, %v1594
    %v1596 = vpop.f32.mrb[0].mxu0
    %1597 = vdwg.mxu0
    %v1598 = vadd.f32 %v1524, %v1595
    %v1599 = vtanh.pop %v1598
    %1600 = vst.msk [vmem:[#allocation2 + $0xe] sm:$0x3] %vm347, %v1599
    %v1601 = vld [vmem:[#allocation2] sm:$0xff]
    %v1602 = vld [vmem:[#allocation2 + $0x8] sm:$0xff]
    %v1603 = vld [vmem:[%s7] sm:$0xff]
    %v1604 = vld [vmem:[%s7 + $0x8] sm:$0xff]
    %v1605 = vld [vmem:[%s7 + $0x10] sm:$0xff]
    %v1606 = vld [vmem:[%s7 + $0x18] sm:$0xff]
    %v1607 = vld [vmem:[%s8] sm:$0x1]
    %v1609 = vlaneseq
    %v1610 = vshrl.u32 %v1609, 7
    %v1611 = vsub.s32 0, %v1610
    %v1612 = vrot.slane %v1607, %v1611
    %v1615 = vsel %vm33, %v1601, 0
    %v1618 = vsel %vm33, %v1602, 0
    %1620 = vmatprep.subr.mxu0 0.0
    %1621 = vmatpush1.msra.mxu0 %v1603
    %1622 = vmatprep.subr.mxu0 0.0
    %1623 = vmatpush1.msra.mxu0 %v1604
    %1624 = vmatprep.subr.mxu0 0.0
    %1625 = vmatpush1.msra.mxu0 %v1605
    %1626 = vmatprep.subr.mxu0 0.0
    %1627 = vmatpush1.msra.mxu0 %v1606
    %1628 = vmatprep.subr.mxu0 0.0
    %1629 = vmatpush1.msra.mxu0 0.0
    %1630 = vmatprep.subr.mxu0 0.0
    %1631 = vmatpush1.msra.mxu0 0.0
    %1632 = vmatprep.subr.mxu0 0.0
    %1633 = vmatpush1.msra.mxu0 0.0
    %1634 = vmatprep.subr.mxu0 0.0
    %1635 = vmatpush1.msra.mxu0 0.0
    %1636 = vmatprep.subr.mxu0 0.0
    %1637 = vmatpush1.msra.mxu0 0.0
    %1638 = vmatprep.subr.mxu0 0.0
    %1639 = vmatpush1.msra.mxu0 0.0
    %1640 = vmatprep.subr.mxu0 0.0
    %1641 = vmatpush1.msra.mxu0 0.0
    %1642 = vmatprep.subr.mxu0 0.0
    %1643 = vmatpush1.msra.mxu0 0.0
    %1644 = vmatprep.subr.mxu0 0.0
    %1645 = vmatpush1.msra.mxu0 0.0
    %1646 = vmatprep.subr.mxu0 0.0
    %1647 = vmatpush1.msra.mxu0 0.0
    %1648 = vmatprep.subr.mxu0 0.0
    %1649 = vmatpush1.msra.mxu0 0.0
    %1650 = vmatprep.subr.mxu0 0.0
    %1651 = vmatpush1.msra.mxu0 0.0
    %1652 = vmatprep.subr.mxu0 0.0
    %1653 = vmatpush1.msra.mxu0 0.0
    %1654 = vmatprep.subr.mxu0 0.0
    %1655 = vmatpush1.msra.mxu0 0.0
    %1656 = vmatprep.subr.mxu0 0.0
    %1657 = vmatpush1.msra.mxu0 0.0
    %1658 = vmatprep.subr.mxu0 0.0
    %1659 = vmatpush1.msra.mxu0 0.0
    %1660 = vmatprep.subr.mxu0 0.0
    %1661 = vmatpush1.msra.mxu0 0.0
    %1662 = vmatprep.subr.mxu0 0.0
    %1663 = vmatpush1.msra.mxu0 0.0
    %1664 = vmatprep.subr.mxu0 0.0
    %1665 = vmatpush1.msra.mxu0 0.0
    %1666 = vmatprep.subr.mxu0 0.0
    %1667 = vmatpush1.msra.mxu0 0.0
    %1668 = vmatprep.subr.mxu0 0.0
    %1669 = vmatpush1.msra.mxu0 0.0
    %1670 = vmatprep.subr.mxu0 0.0
    %1671 = vmatpush1.msra.mxu0 0.0
    %1672 = vmatprep.subr.mxu0 0.0
    %1673 = vmatpush1.msra.mxu0 0.0
    %1674 = vmatprep.subr.mxu0 0.0
    %1675 = vmatpush1.msra.mxu0 0.0
    %1676 = vmatprep.subr.mxu0 0.0
    %1677 = vmatpush1.msra.mxu0 0.0
    %1678 = vmatprep.subr.mxu0 0.0
    %1679 = vmatpush1.msra.mxu0 0.0
    %1680 = vmatprep.subr.mxu0 0.0
    %1681 = vmatpush1.msra.mxu0 0.0
    %1682 = vmatprep.subr.mxu0 0.0
    %1683 = vmatpush1.msra.mxu0 0.0
    %1684 = vmatprep.mubr.f32.mxu0 0.0
    %1685 = vmatmul.mubr.f32.gmra.mrb[0].mxu0 %v1615
    %v1686 = vpop.f32.mrb[0].mxu0
    %v1687 = vadd.f32 %v1612, %v1686
    %v1688 = vpop.f32.mrb[0].mxu0
    %1689 = vmatprep.mubr.f32.mxu0 0.0
    %1690 = vmatmul.mubr.f32.gmra.mrb[0].mxu0 %v1618
    %v1691 = vpop.f32.mrb[0].mxu0
    %v1692 = vadd.f32 %v1612, %v1691
    %v1693 = vpop.f32.mrb[0].mxu0
    %1694 = vdwg.mxu0
    %1695 = vst [vmem:[#allocation4] sm:$0xff] %v1687
    %1696 = vst [vmem:[#allocation4 + $0x8] sm:$0xff] %v1692
    // Predicated region
    $region38: #{tpu_custom_call.1} parent=1 // pred_check
      _
    $region39: #{tpu_custom_call.1} parent=1 // pred_check_branch
      %1698 = sbr.rel (0) target = $region41
    $region40: #{tpu_custom_call.1} parent=1 // pred_region
      %s1700 = ssub.s32 256, 256
      %1701 = vsyncadd [#allocation5], %s1700
      %s1702 = sshll.u32 [#allocation4], 4
      %s1703 = int_to_ptr.vmem [resolvable:$true] %s1702
      %1708 = dma.vmem_to_hbm [thread:$0]  %s1703, 256, %s9, [#allocation5], 128, 128, 8
    $region41: #{tpu_custom_call.1} parent=1 // pred_fallthru
      _
    // Predicated region
    $region42: #{tpu_custom_call.1} parent=1 // pred_check
      _
    $region43: #{tpu_custom_call.1} parent=1 // pred_check_branch
      %1710 = sbr.rel (0) target = $region45
    $region44: #{tpu_custom_call.1} parent=1 // pred_region
      %1711 = dma.done [#allocation5], 256
    $region45: #{tpu_custom_call.1} parent=1 // pred_fallthru
      _
    %1712 = vsyncpa [#allocation5], 1

</llo_original>
